<compile_context>
chip_gen: v5e
topology: v5e:2x2
jax: 0.10.0
libtpu: 0.0.40
codegen_flags: <defaults>
</compile_context>

<pallas_src>
import functools

import jax
import jax.numpy as jnp
from jax import lax
from jax.experimental import pallas as pl
from jax.experimental.pallas import tpu as pltpu

HIDDEN = 128     # nn.LSTM(hidden_size=128)
_LANE = 128
_SUBLANE = 8


def _round_up(x, m):
    return (x + m - 1) // m * m


def _lstm_kernel(x_ref, w_ref, b_ref, wout_ref, bout_ref, out_ref,
                 h_ref, c_ref, *, seq_len, t_chunk, num_chunks, hidden):
    """Grid = (batch_shards, time_chunks). One invocation runs a whole time chunk
    for one batch shard; h/c persist in VMEM scratch across time chunks."""
    chunk = pl.program_id(1)
    H = hidden
    B = h_ref.shape[0]

    # Reset recurrent state at the first time chunk of every batch shard.
    @pl.when(chunk == 0)
    def _():
        h_ref[...] = jnp.zeros_like(h_ref)
        c_ref[...] = jnp.zeros_like(c_ref)

    # Hoisted out of the time loop (JAX does not CSE broadcast_in_dim).
    bias = jnp.broadcast_to(b_ref[...], (B, 4 * H))            # (B, 4H) f32

    def step(i, carry):
        h, c = carry                                           # f32 (B, H)
        x_t = x_ref[i]                                         # bf16 (B, D_pad)
        # Fused K = D_pad + H = 256 gate matmul on the MXU (bf16 in, f32 acc).
        xh = jnp.concatenate([x_t, h.astype(jnp.bfloat16)], axis=-1)
        gates = jnp.dot(xh, w_ref[...],
                        preferred_element_type=jnp.float32) + bias   # (B, 4H) f32
        # PyTorch LSTM gate order: i, f, g, o (each slice is 128-lane aligned).
        i_g = jax.nn.sigmoid(gates[:, 0 * H:1 * H])
        f_g = jax.nn.sigmoid(gates[:, 1 * H:2 * H])
        g_g = jnp.tanh(gates[:, 2 * H:3 * H])
        o_g = jax.nn.sigmoid(gates[:, 3 * H:4 * H])
        c_new = f_g * c + i_g * g_g
        h_new = o_g * jnp.tanh(c_new)
        return h_new, c_new

    carry0 = (h_ref[...], c_ref[...])
    if num_chunks == 1:
        # Static trip count: fully unroll so the scheduler can overlap the MXU
        # latency of each step with the surrounding VPU/EUP gate math.
        h_new, c_new = lax.fori_loop(0, seq_len, step, carry0, unroll=True)
    else:
        n_steps = jnp.minimum(t_chunk, seq_len - chunk * t_chunk)
        h_new, c_new = lax.fori_loop(0, n_steps, step, carry0)

    h_ref[...] = h_new
    c_ref[...] = c_new

    # Output head (self.out(r_out[:, -1, :])), only after the last time chunk.
    # Output block is (B, C_pad=128) -> lane-dense stores.
    @pl.when(chunk == num_chunks - 1)
    def _():
        out_ref[...] = (jnp.dot(h_new.astype(jnp.bfloat16), wout_ref[...],
                                preferred_element_type=jnp.float32)
                        + bout_ref[...]).astype(out_ref.dtype)


@jax.jit
def rnn_forward(x, w_ih, w_hh, b_ih, b_hh, w_out, b_out):
    """x: (B, T, D) f32, weights in PyTorch layout. Returns (B, class_n) f32."""
    B, T, D = x.shape
    H = HIDDEN
    C = w_out.shape[0]

    # ---- padded / tiled sizes ------------------------------------------------
    D_pad = _round_up(D, _LANE)        # so [x || h] concat is 128-lane aligned
    C_pad = _round_up(C, _LANE)        # lane-dense output block
    B_pad = _round_up(B, _SUBLANE)     # fill vreg sublanes / MXU rows
    if B_pad <= _LANE:
        b_shard = B_pad
    else:
        B_pad = _round_up(B_pad, _LANE)
        b_shard = _LANE                # one MXU-height shard per grid step
    num_b = B_pad // b_shard

    t_chunk = min(T, 128)              # 2 * t_chunk * b_shard * D_pad * 2B << VMEM
    num_chunks = pl.cdiv(T, t_chunk)
    T_pad = num_chunks * t_chunk

    # ---- operand prep (one fused transpose/pad/cast pass over x in XLA) ------
    x_tbd = jnp.transpose(x, (1, 0, 2))
    x_tbd = jnp.pad(x_tbd, ((0, T_pad - T), (0, B_pad - B), (0, D_pad - D)))
    x_tbd = x_tbd.astype(jnp.bfloat16)                        # (T_pad, B_pad, D_pad)

    wih_t = jnp.pad(w_ih.T, ((0, D_pad - D), (0, 0)))         # zero rows beyond D
    w_fused = jnp.concatenate([wih_t, w_hh.T], axis=0).astype(jnp.bfloat16)  # (D_pad+H, 4H)
    bias = (b_ih + b_hh).reshape(1, 4 * H).astype(jnp.float32)
    wout_t = jnp.pad(w_out.T, ((0, 0), (0, C_pad - C))).astype(jnp.bfloat16)  # (H, C_pad)
    bout = jnp.pad(b_out, (0, C_pad - C)).reshape(1, C_pad).astype(jnp.float32)

    kernel = functools.partial(_lstm_kernel, seq_len=T, t_chunk=t_chunk,
                               num_chunks=num_chunks, hidden=H)

    grid_spec = pltpu.PrefetchScalarGridSpec(
        num_scalar_prefetch=0,
        grid=(num_b, num_chunks),
        in_specs=[
            pl.BlockSpec((t_chunk, b_shard, D_pad), lambda b, t: (t, b, 0)),  # x chunk
            pl.BlockSpec((D_pad + H, 4 * H), lambda b, t: (0, 0)),            # fused gate W (resident)
            pl.BlockSpec((1, 4 * H), lambda b, t: (0, 0)),                    # fused bias
            pl.BlockSpec((H, C_pad), lambda b, t: (0, 0)),                    # head W (resident)
            pl.BlockSpec((1, C_pad), lambda b, t: (0, 0)),                    # head bias
        ],
        out_specs=pl.BlockSpec((b_shard, C_pad), lambda b, t: (b, 0)),
        scratch_shapes=[
            pltpu.VMEM((b_shard, H), jnp.float32),   # h state
            pltpu.VMEM((b_shard, H), jnp.float32),   # c state
        ],
    )

    out = pl.pallas_call(
        kernel,
        out_shape=jax.ShapeDtypeStruct((B_pad, C_pad), jnp.float32),
        grid_spec=grid_spec,
        compiler_params=pltpu.CompilerParams(
            # Batch shards are independent (v7x megacore); time recurrence is serial.
            dimension_semantics=("parallel", "arbitrary"),
            vmem_limit_bytes=32 * 1024 * 1024,
        ),
    )(x_tbd, w_fused, bias, wout_t, bout)

    return out[:B, :C]


def _reference_forward(x, w_ih, w_hh, b_ih, b_hh, w_out, b_out):
    """Pure-JAX f32 reference of the PyTorch module forward."""
    B, T, D = x.shape
    H = HIDDEN
    h = jnp.zeros((B, H), jnp.float32)
    c = jnp.zeros((B, H), jnp.float32)

    def step(carry, x_t):
        h, c = carry
        gates = x_t @ w_ih.T + h @ w_hh.T + b_ih + b_hh
        i = jax.nn.sigmoid(gates[:, 0 * H:1 * H])
        f = jax.nn.sigmoid(gates[:, 1 * H:2 * H])
        g = jnp.tanh(gates[:, 2 * H:3 * H])
        o = jax.nn.sigmoid(gates[:, 3 * H:4 * H])
        c = f * c + i * g
        h = o * jnp.tanh(c)
        return (h, c), None

    (h, c), _ = jax.lax.scan(step, (h, c), jnp.transpose(x, (1, 0, 2)))
    return h @ w_out.T + b_out


if __name__ == "__main__":
    # Small shapes consistent with the module: batch=2, seq=8, Input_Size=16, class_n=4
    B, T, D, H, C = 2, 8, 16, HIDDEN, 4

    key = jax.random.PRNGKey(0)
    kx, k1, k2, k3, k4, k5 = jax.random.split(key, 6)

    x = jax.random.normal(kx, (B, T, D), jnp.float32)

    # PyTorch-style LSTM init: U(-1/sqrt(H), 1/sqrt(H))
    bound = 1.0 / jnp.sqrt(jnp.float32(H))
    w_ih = jax.random.uniform(k1, (4 * H, D), jnp.float32, -bound, bound)
    w_hh = jax.random.uniform(k2, (4 * H, H), jnp.float32, -bound, bound)
    b_ih = jax.random.uniform(k3, (4 * H,), jnp.float32, -bound, bound)
    b_hh = jax.random.uniform(k4, (4 * H,), jnp.float32, -bound, bound)
    # Linear head: normal(0, 0.01) weight, zero bias (matches initialize_weights)
    w_out = 0.01 * jax.random.normal(k5, (C, H), jnp.float32)
    b_out = jnp.zeros((C,), jnp.float32)

    out = rnn_forward(x, w_ih, w_hh, b_ih, b_hh, w_out, b_out)
    out = jax.block_until_ready(out)

    ref = _reference_forward(x, w_ih, w_hh, b_ih, b_hh, w_out, b_out)
    assert out.shape == (B, C)
    # Kernel feeds the MXU in bf16 (f32 accumulate); reference is pure f32,
    # hence the slightly looser tolerance (observed error is ~1e-3).
    assert jnp.allclose(out, ref, atol=2e-2, rtol=2e-2), "mismatch vs reference"

    print("KERNEL_OK")
</pallas_src>

<mosaic_0001>
module attributes {stable_mosaic.version = 11 : i64} {
  func.func @_lstm_kernel(%arg0: i32, %arg1: i32, %arg2: memref<8x8x128xbf16, #tpu.memory_space<vmem>>, %arg3: memref<256x512xbf16, #tpu.memory_space<vmem>>, %arg4: memref<1x512xf32, #tpu.memory_space<vmem>>, %arg5: memref<128x128xbf16, #tpu.memory_space<vmem>>, %arg6: memref<1x128xf32, #tpu.memory_space<vmem>>, %arg7: memref<8x128xf32, #tpu.memory_space<vmem>>, %arg8: memref<8x128xf32, #tpu.memory_space<vmem>>, %arg9: memref<8x128xf32, #tpu.memory_space<vmem>>) attributes {dimension_semantics = [#tpu.dimension_semantics<parallel>, #tpu.dimension_semantics<arbitrary>], iteration_bounds = array<i64: 1, 1>, scalar_prefetch = 0 : i64, scratch_operands = 2 : i64, tpu.core_type = #tpu.core_type<tc>, window_params = [{transform_indices = @transform_0, window_bounds = array<i64: 8, 8, 128>}, {pipeline_mode = #tpu.pipeline_mode<synchronous>, transform_indices = @transform_1, window_bounds = array<i64: 256, 512>}, {pipeline_mode = #tpu.pipeline_mode<synchronous>, transform_indices = @transform_2, window_bounds = array<i64: 1, 512>}, {pipeline_mode = #tpu.pipeline_mode<synchronous>, transform_indices = @transform_3, window_bounds = array<i64: 128, 128>}, {pipeline_mode = #tpu.pipeline_mode<synchronous>, transform_indices = @transform_4, window_bounds = array<i64: 1, 128>}, {transform_indices = @transform_5, window_bounds = array<i64: 8, 128>}]} {
    %c0_i32 = arith.constant 0 : i32
    %0 = arith.cmpi eq, %arg1, %c0_i32 : i32
    %1 = arith.extui %0 : i1 to i32
    %c0_i32_0 = arith.constant 0 : i32
    %2 = arith.cmpi ne, %1, %c0_i32_0 : i32
    scf.if %2 {
      %cst_76 = arith.constant 0.000000e+00 : f32
      %277 = vector.broadcast %cst_76 : f32 to vector<8x128xf32>
      %c0_77 = arith.constant 0 : index
      %c0_78 = arith.constant 0 : index
      %278 = vector.load %arg8[%c0_77, %c0_78] : memref<8x128xf32, #tpu.memory_space<vmem>>, vector<8x128xf32>
      tpu.vector_store %arg8[%c0_77, %c0_78], %277 {strides = array<i32>} : memref<8x128xf32, #tpu.memory_space<vmem>>, vector<8x128xf32>,
      %cst_79 = arith.constant 0.000000e+00 : f32
      %279 = vector.broadcast %cst_79 : f32 to vector<8x128xf32>
      %c0_80 = arith.constant 0 : index
      %c0_81 = arith.constant 0 : index
      %280 = vector.load %arg9[%c0_80, %c0_81] : memref<8x128xf32, #tpu.memory_space<vmem>>, vector<8x128xf32>
      tpu.vector_store %arg9[%c0_80, %c0_81], %279 {strides = array<i32>} : memref<8x128xf32, #tpu.memory_space<vmem>>, vector<8x128xf32>,
    } else {
    }
    %c0 = arith.constant 0 : index
    %c0_1 = arith.constant 0 : index
    %3 = vector.load %arg4[%c0, %c0_1] : memref<1x512xf32, #tpu.memory_space<vmem>>, vector<1x512xf32>
    %4 = vector.shape_cast %3 : vector<1x512xf32> to vector<1x512xf32>
    %5 = vector.broadcast %4 : vector<1x512xf32> to vector<8x512xf32>
    %c0_2 = arith.constant 0 : index
    %c0_3 = arith.constant 0 : index
    %6 = vector.load %arg8[%c0_2, %c0_3] : memref<8x128xf32, #tpu.memory_space<vmem>>, vector<8x128xf32>
    %c0_4 = arith.constant 0 : index
    %c0_5 = arith.constant 0 : index
    %7 = vector.load %arg9[%c0_4, %c0_5] : memref<8x128xf32, #tpu.memory_space<vmem>>, vector<8x128xf32>
    %c0_i32_6 = arith.constant 0 : i32
    %8 = arith.index_cast %c0_i32_6 : i32 to index
    %c0_7 = arith.constant 0 : index
    %c0_8 = arith.constant 0 : index
    %9 = vector.load %arg2[%8, %c0_7, %c0_8] : memref<8x8x128xbf16, #tpu.memory_space<vmem>>, vector<1x8x128xbf16>
    %10 = vector.shape_cast %9 : vector<1x8x128xbf16> to vector<8x128xbf16>
    %11 = arith.truncf %6 : vector<8x128xf32> to vector<8x128xbf16>
    %12 = tpu.concatenate %10, %11 in 1 : vector<8x128xbf16>, vector<8x128xbf16> -> vector<8x256xbf16>
    %c0_9 = arith.constant 0 : index
    %c0_10 = arith.constant 0 : index
    %13 = vector.load %arg3[%c0_9, %c0_10] : memref<256x512xbf16, #tpu.memory_space<vmem>>, vector<256x512xbf16>
    %cst = arith.constant dense<0.000000e+00> : vector<8x512xf32>
    %14 = tpu.matmul %12, %13, %cst {dimension_numbers = #tpu.dot_dimension_numbers<[1], [0], [0], [1], [0, 0, 1, 1], [], []>} : vector<8x256xbf16>, vector<256x512xbf16>, vector<8x512xf32> -> vector<8x512xf32>
    %15 = arith.addf %14, %5 : vector<8x512xf32>
    %16 = vector.extract_strided_slice %15 {offsets = [0, 0], sizes = [8, 128], strides = [1, 1]} : vector<8x512xf32> to vector<8x128xf32>
    %17 = arith.negf %16 : vector<8x128xf32>
    %18 = math.exp %17 : vector<8x128xf32>
    %cst_11 = arith.constant 1.000000e+00 : f32
    %19 = vector.broadcast %cst_11 : f32 to vector<8x128xf32>
    %20 = arith.addf %19, %18 : vector<8x128xf32>
    %21 = arith.divf %19, %20 : vector<8x128xf32>
    %22 = vector.extract_strided_slice %15 {offsets = [0, 128], sizes = [8, 128], strides = [1, 1]} : vector<8x512xf32> to vector<8x128xf32>
    %23 = arith.negf %22 : vector<8x128xf32>
    %24 = math.exp %23 : vector<8x128xf32>
    %cst_12 = arith.constant 1.000000e+00 : f32
    %25 = vector.broadcast %cst_12 : f32 to vector<8x128xf32>
    %26 = arith.addf %25, %24 : vector<8x128xf32>
    %27 = arith.divf %25, %26 : vector<8x128xf32>
    %28 = vector.extract_strided_slice %15 {offsets = [0, 256], sizes = [8, 128], strides = [1, 1]} : vector<8x512xf32> to vector<8x128xf32>
    %29 = math.tanh %28 : vector<8x128xf32>
    %30 = vector.extract_strided_slice %15 {offsets = [0, 384], sizes = [8, 128], strides = [1, 1]} : vector<8x512xf32> to vector<8x128xf32>
    %31 = arith.negf %30 : vector<8x128xf32>
    %32 = math.exp %31 : vector<8x128xf32>
    %cst_13 = arith.constant 1.000000e+00 : f32
    %33 = vector.broadcast %cst_13 : f32 to vector<8x128xf32>
    %34 = arith.addf %33, %32 : vector<8x128xf32>
    %35 = arith.divf %33, %34 : vector<8x128xf32>
    %36 = arith.mulf %27, %7 : vector<8x128xf32>
    %37 = arith.mulf %21, %29 : vector<8x128xf32>
    %38 = arith.addf %36, %37 : vector<8x128xf32>
    %39 = math.tanh %38 : vector<8x128xf32>
    %40 = arith.mulf %35, %39 : vector<8x128xf32>
    %c1_i32 = arith.constant 1 : i32
    %41 = arith.index_cast %c1_i32 : i32 to index
    %c0_14 = arith.constant 0 : index
    %c0_15 = arith.constant 0 : index
    %42 = vector.load %arg2[%41, %c0_14, %c0_15] : memref<8x8x128xbf16, #tpu.memory_space<vmem>>, vector<1x8x128xbf16>
    %43 = vector.shape_cast %42 : vector<1x8x128xbf16> to vector<8x128xbf16>
    %44 = arith.truncf %40 : vector<8x128xf32> to vector<8x128xbf16>
    %45 = tpu.concatenate %43, %44 in 1 : vector<8x128xbf16>, vector<8x128xbf16> -> vector<8x256xbf16>
    %c0_16 = arith.constant 0 : index
    %c0_17 = arith.constant 0 : index
    %46 = vector.load %arg3[%c0_16, %c0_17] : memref<256x512xbf16, #tpu.memory_space<vmem>>, vector<256x512xbf16>
    %cst_18 = arith.constant dense<0.000000e+00> : vector<8x512xf32>
    %47 = tpu.matmul %45, %46, %cst_18 {dimension_numbers = #tpu.dot_dimension_numbers<[1], [0], [0], [1], [0, 0, 1, 1], [], []>} : vector<8x256xbf16>, vector<256x512xbf16>, vector<8x512xf32> -> vector<8x512xf32>
    %48 = arith.addf %47, %5 : vector<8x512xf32>
    %49 = vector.extract_strided_slice %48 {offsets = [0, 0], sizes = [8, 128], strides = [1, 1]} : vector<8x512xf32> to vector<8x128xf32>
    %50 = arith.negf %49 : vector<8x128xf32>
    %51 = math.exp %50 : vector<8x128xf32>
    %cst_19 = arith.constant 1.000000e+00 : f32
    %52 = vector.broadcast %cst_19 : f32 to vector<8x128xf32>
    %53 = arith.addf %52, %51 : vector<8x128xf32>
    %54 = arith.divf %52, %53 : vector<8x128xf32>
    %55 = vector.extract_strided_slice %48 {offsets = [0, 128], sizes = [8, 128], strides = [1, 1]} : vector<8x512xf32> to vector<8x128xf32>
    %56 = arith.negf %55 : vector<8x128xf32>
    %57 = math.exp %56 : vector<8x128xf32>
    %cst_20 = arith.constant 1.000000e+00 : f32
    %58 = vector.broadcast %cst_20 : f32 to vector<8x128xf32>
    %59 = arith.addf %58, %57 : vector<8x128xf32>
    %60 = arith.divf %58, %59 : vector<8x128xf32>
    %61 = vector.extract_strided_slice %48 {offsets = [0, 256], sizes = [8, 128], strides = [1, 1]} : vector<8x512xf32> to vector<8x128xf32>
    %62 = math.tanh %61 : vector<8x128xf32>
    %63 = vector.extract_strided_slice %48 {offsets = [0, 384], sizes = [8, 128], strides = [1, 1]} : vector<8x512xf32> to vector<8x128xf32>
    %64 = arith.negf %63 : vector<8x128xf32>
    %65 = math.exp %64 : vector<8x128xf32>
    %cst_21 = arith.constant 1.000000e+00 : f32
    %66 = vector.broadcast %cst_21 : f32 to vector<8x128xf32>
    %67 = arith.addf %66, %65 : vector<8x128xf32>
    %68 = arith.divf %66, %67 : vector<8x128xf32>
    %69 = arith.mulf %60, %38 : vector<8x128xf32>
    %70 = arith.mulf %54, %62 : vector<8x128xf32>
    %71 = arith.addf %69, %70 : vector<8x128xf32>
    %72 = math.tanh %71 : vector<8x128xf32>
    %73 = arith.mulf %68, %72 : vector<8x128xf32>
    %c2_i32 = arith.constant 2 : i32
    %74 = arith.index_cast %c2_i32 : i32 to index
    %c0_22 = arith.constant 0 : index
    %c0_23 = arith.constant 0 : index
    %75 = vector.load %arg2[%74, %c0_22, %c0_23] : memref<8x8x128xbf16, #tpu.memory_space<vmem>>, vector<1x8x128xbf16>
    %76 = vector.shape_cast %75 : vector<1x8x128xbf16> to vector<8x128xbf16>
    %77 = arith.truncf %73 : vector<8x128xf32> to vector<8x128xbf16>
    %78 = tpu.concatenate %76, %77 in 1 : vector<8x128xbf16>, vector<8x128xbf16> -> vector<8x256xbf16>
    %c0_24 = arith.constant 0 : index
    %c0_25 = arith.constant 0 : index
    %79 = vector.load %arg3[%c0_24, %c0_25] : memref<256x512xbf16, #tpu.memory_space<vmem>>, vector<256x512xbf16>
    %cst_26 = arith.constant dense<0.000000e+00> : vector<8x512xf32>
    %80 = tpu.matmul %78, %79, %cst_26 {dimension_numbers = #tpu.dot_dimension_numbers<[1], [0], [0], [1], [0, 0, 1, 1], [], []>} : vector<8x256xbf16>, vector<256x512xbf16>, vector<8x512xf32> -> vector<8x512xf32>
    %81 = arith.addf %80, %5 : vector<8x512xf32>
    %82 = vector.extract_strided_slice %81 {offsets = [0, 0], sizes = [8, 128], strides = [1, 1]} : vector<8x512xf32> to vector<8x128xf32>
    %83 = arith.negf %82 : vector<8x128xf32>
    %84 = math.exp %83 : vector<8x128xf32>
    %cst_27 = arith.constant 1.000000e+00 : f32
    %85 = vector.broadcast %cst_27 : f32 to vector<8x128xf32>
    %86 = arith.addf %85, %84 : vector<8x128xf32>
    %87 = arith.divf %85, %86 : vector<8x128xf32>
    %88 = vector.extract_strided_slice %81 {offsets = [0, 128], sizes = [8, 128], strides = [1, 1]} : vector<8x512xf32> to vector<8x128xf32>
    %89 = arith.negf %88 : vector<8x128xf32>
    %90 = math.exp %89 : vector<8x128xf32>
    %cst_28 = arith.constant 1.000000e+00 : f32
    %91 = vector.broadcast %cst_28 : f32 to vector<8x128xf32>
    %92 = arith.addf %91, %90 : vector<8x128xf32>
    %93 = arith.divf %91, %92 : vector<8x128xf32>
    %94 = vector.extract_strided_slice %81 {offsets = [0, 256], sizes = [8, 128], strides = [1, 1]} : vector<8x512xf32> to vector<8x128xf32>
    %95 = math.tanh %94 : vector<8x128xf32>
    %96 = vector.extract_strided_slice %81 {offsets = [0, 384], sizes = [8, 128], strides = [1, 1]} : vector<8x512xf32> to vector<8x128xf32>
    %97 = arith.negf %96 : vector<8x128xf32>
    %98 = math.exp %97 : vector<8x128xf32>
    %cst_29 = arith.constant 1.000000e+00 : f32
    %99 = vector.broadcast %cst_29 : f32 to vector<8x128xf32>
    %100 = arith.addf %99, %98 : vector<8x128xf32>
    %101 = arith.divf %99, %100 : vector<8x128xf32>
    %102 = arith.mulf %93, %71 : vector<8x128xf32>
    %103 = arith.mulf %87, %95 : vector<8x128xf32>
    %104 = arith.addf %102, %103 : vector<8x128xf32>
    %105 = math.tanh %104 : vector<8x128xf32>
    %106 = arith.mulf %101, %105 : vector<8x128xf32>
    %c3_i32 = arith.constant 3 : i32
    %107 = arith.index_cast %c3_i32 : i32 to index
    %c0_30 = arith.constant 0 : index
    %c0_31 = arith.constant 0 : index
    %108 = vector.load %arg2[%107, %c0_30, %c0_31] : memref<8x8x128xbf16, #tpu.memory_space<vmem>>, vector<1x8x128xbf16>
    %109 = vector.shape_cast %108 : vector<1x8x128xbf16> to vector<8x128xbf16>
    %110 = arith.truncf %106 : vector<8x128xf32> to vector<8x128xbf16>
    %111 = tpu.concatenate %109, %110 in 1 : vector<8x128xbf16>, vector<8x128xbf16> -> vector<8x256xbf16>
    %c0_32 = arith.constant 0 : index
    %c0_33 = arith.constant 0 : index
    %112 = vector.load %arg3[%c0_32, %c0_33] : memref<256x512xbf16, #tpu.memory_space<vmem>>, vector<256x512xbf16>
    %cst_34 = arith.constant dense<0.000000e+00> : vector<8x512xf32>
    %113 = tpu.matmul %111, %112, %cst_34 {dimension_numbers = #tpu.dot_dimension_numbers<[1], [0], [0], [1], [0, 0, 1, 1], [], []>} : vector<8x256xbf16>, vector<256x512xbf16>, vector<8x512xf32> -> vector<8x512xf32>
    %114 = arith.addf %113, %5 : vector<8x512xf32>
    %115 = vector.extract_strided_slice %114 {offsets = [0, 0], sizes = [8, 128], strides = [1, 1]} : vector<8x512xf32> to vector<8x128xf32>
    %116 = arith.negf %115 : vector<8x128xf32>
    %117 = math.exp %116 : vector<8x128xf32>
    %cst_35 = arith.constant 1.000000e+00 : f32
    %118 = vector.broadcast %cst_35 : f32 to vector<8x128xf32>
    %119 = arith.addf %118, %117 : vector<8x128xf32>
    %120 = arith.divf %118, %119 : vector<8x128xf32>
    %121 = vector.extract_strided_slice %114 {offsets = [0, 128], sizes = [8, 128], strides = [1, 1]} : vector<8x512xf32> to vector<8x128xf32>
    %122 = arith.negf %121 : vector<8x128xf32>
    %123 = math.exp %122 : vector<8x128xf32>
    %cst_36 = arith.constant 1.000000e+00 : f32
    %124 = vector.broadcast %cst_36 : f32 to vector<8x128xf32>
    %125 = arith.addf %124, %123 : vector<8x128xf32>
    %126 = arith.divf %124, %125 : vector<8x128xf32>
    %127 = vector.extract_strided_slice %114 {offsets = [0, 256], sizes = [8, 128], strides = [1, 1]} : vector<8x512xf32> to vector<8x128xf32>
    %128 = math.tanh %127 : vector<8x128xf32>
    %129 = vector.extract_strided_slice %114 {offsets = [0, 384], sizes = [8, 128], strides = [1, 1]} : vector<8x512xf32> to vector<8x128xf32>
    %130 = arith.negf %129 : vector<8x128xf32>
    %131 = math.exp %130 : vector<8x128xf32>
    %cst_37 = arith.constant 1.000000e+00 : f32
    %132 = vector.broadcast %cst_37 : f32 to vector<8x128xf32>
    %133 = arith.addf %132, %131 : vector<8x128xf32>
    %134 = arith.divf %132, %133 : vector<8x128xf32>
    %135 = arith.mulf %126, %104 : vector<8x128xf32>
    %136 = arith.mulf %120, %128 : vector<8x128xf32>
    %137 = arith.addf %135, %136 : vector<8x128xf32>
    %138 = math.tanh %137 : vector<8x128xf32>
    %139 = arith.mulf %134, %138 : vector<8x128xf32>
    %c4_i32 = arith.constant 4 : i32
    %140 = arith.index_cast %c4_i32 : i32 to index
    %c0_38 = arith.constant 0 : index
    %c0_39 = arith.constant 0 : index
    %141 = vector.load %arg2[%140, %c0_38, %c0_39] : memref<8x8x128xbf16, #tpu.memory_space<vmem>>, vector<1x8x128xbf16>
    %142 = vector.shape_cast %141 : vector<1x8x128xbf16> to vector<8x128xbf16>
    %143 = arith.truncf %139 : vector<8x128xf32> to vector<8x128xbf16>
    %144 = tpu.concatenate %142, %143 in 1 : vector<8x128xbf16>, vector<8x128xbf16> -> vector<8x256xbf16>
    %c0_40 = arith.constant 0 : index
    %c0_41 = arith.constant 0 : index
    %145 = vector.load %arg3[%c0_40, %c0_41] : memref<256x512xbf16, #tpu.memory_space<vmem>>, vector<256x512xbf16>
    %cst_42 = arith.constant dense<0.000000e+00> : vector<8x512xf32>
    %146 = tpu.matmul %144, %145, %cst_42 {dimension_numbers = #tpu.dot_dimension_numbers<[1], [0], [0], [1], [0, 0, 1, 1], [], []>} : vector<8x256xbf16>, vector<256x512xbf16>, vector<8x512xf32> -> vector<8x512xf32>
    %147 = arith.addf %146, %5 : vector<8x512xf32>
    %148 = vector.extract_strided_slice %147 {offsets = [0, 0], sizes = [8, 128], strides = [1, 1]} : vector<8x512xf32> to vector<8x128xf32>
    %149 = arith.negf %148 : vector<8x128xf32>
    %150 = math.exp %149 : vector<8x128xf32>
    %cst_43 = arith.constant 1.000000e+00 : f32
    %151 = vector.broadcast %cst_43 : f32 to vector<8x128xf32>
    %152 = arith.addf %151, %150 : vector<8x128xf32>
    %153 = arith.divf %151, %152 : vector<8x128xf32>
    %154 = vector.extract_strided_slice %147 {offsets = [0, 128], sizes = [8, 128], strides = [1, 1]} : vector<8x512xf32> to vector<8x128xf32>
    %155 = arith.negf %154 : vector<8x128xf32>
    %156 = math.exp %155 : vector<8x128xf32>
    %cst_44 = arith.constant 1.000000e+00 : f32
    %157 = vector.broadcast %cst_44 : f32 to vector<8x128xf32>
    %158 = arith.addf %157, %156 : vector<8x128xf32>
    %159 = arith.divf %157, %158 : vector<8x128xf32>
    %160 = vector.extract_strided_slice %147 {offsets = [0, 256], sizes = [8, 128], strides = [1, 1]} : vector<8x512xf32> to vector<8x128xf32>
    %161 = math.tanh %160 : vector<8x128xf32>
    %162 = vector.extract_strided_slice %147 {offsets = [0, 384], sizes = [8, 128], strides = [1, 1]} : vector<8x512xf32> to vector<8x128xf32>
    %163 = arith.negf %162 : vector<8x128xf32>
    %164 = math.exp %163 : vector<8x128xf32>
    %cst_45 = arith.constant 1.000000e+00 : f32
    %165 = vector.broadcast %cst_45 : f32 to vector<8x128xf32>
    %166 = arith.addf %165, %164 : vector<8x128xf32>
    %167 = arith.divf %165, %166 : vector<8x128xf32>
    %168 = arith.mulf %159, %137 : vector<8x128xf32>
    %169 = arith.mulf %153, %161 : vector<8x128xf32>
    %170 = arith.addf %168, %169 : vector<8x128xf32>
    %171 = math.tanh %170 : vector<8x128xf32>
    %172 = arith.mulf %167, %171 : vector<8x128xf32>
    %c5_i32 = arith.constant 5 : i32
    %173 = arith.index_cast %c5_i32 : i32 to index
    %c0_46 = arith.constant 0 : index
    %c0_47 = arith.constant 0 : index
    %174 = vector.load %arg2[%173, %c0_46, %c0_47] : memref<8x8x128xbf16, #tpu.memory_space<vmem>>, vector<1x8x128xbf16>
    %175 = vector.shape_cast %174 : vector<1x8x128xbf16> to vector<8x128xbf16>
    %176 = arith.truncf %172 : vector<8x128xf32> to vector<8x128xbf16>
    %177 = tpu.concatenate %175, %176 in 1 : vector<8x128xbf16>, vector<8x128xbf16> -> vector<8x256xbf16>
    %c0_48 = arith.constant 0 : index
    %c0_49 = arith.constant 0 : index
    %178 = vector.load %arg3[%c0_48, %c0_49] : memref<256x512xbf16, #tpu.memory_space<vmem>>, vector<256x512xbf16>
    %cst_50 = arith.constant dense<0.000000e+00> : vector<8x512xf32>
    %179 = tpu.matmul %177, %178, %cst_50 {dimension_numbers = #tpu.dot_dimension_numbers<[1], [0], [0], [1], [0, 0, 1, 1], [], []>} : vector<8x256xbf16>, vector<256x512xbf16>, vector<8x512xf32> -> vector<8x512xf32>
    %180 = arith.addf %179, %5 : vector<8x512xf32>
    %181 = vector.extract_strided_slice %180 {offsets = [0, 0], sizes = [8, 128], strides = [1, 1]} : vector<8x512xf32> to vector<8x128xf32>
    %182 = arith.negf %181 : vector<8x128xf32>
    %183 = math.exp %182 : vector<8x128xf32>
    %cst_51 = arith.constant 1.000000e+00 : f32
    %184 = vector.broadcast %cst_51 : f32 to vector<8x128xf32>
    %185 = arith.addf %184, %183 : vector<8x128xf32>
    %186 = arith.divf %184, %185 : vector<8x128xf32>
    %187 = vector.extract_strided_slice %180 {offsets = [0, 128], sizes = [8, 128], strides = [1, 1]} : vector<8x512xf32> to vector<8x128xf32>
    %188 = arith.negf %187 : vector<8x128xf32>
    %189 = math.exp %188 : vector<8x128xf32>
    %cst_52 = arith.constant 1.000000e+00 : f32
    %190 = vector.broadcast %cst_52 : f32 to vector<8x128xf32>
    %191 = arith.addf %190, %189 : vector<8x128xf32>
    %192 = arith.divf %190, %191 : vector<8x128xf32>
    %193 = vector.extract_strided_slice %180 {offsets = [0, 256], sizes = [8, 128], strides = [1, 1]} : vector<8x512xf32> to vector<8x128xf32>
    %194 = math.tanh %193 : vector<8x128xf32>
    %195 = vector.extract_strided_slice %180 {offsets = [0, 384], sizes = [8, 128], strides = [1, 1]} : vector<8x512xf32> to vector<8x128xf32>
    %196 = arith.negf %195 : vector<8x128xf32>
    %197 = math.exp %196 : vector<8x128xf32>
    %cst_53 = arith.constant 1.000000e+00 : f32
    %198 = vector.broadcast %cst_53 : f32 to vector<8x128xf32>
    %199 = arith.addf %198, %197 : vector<8x128xf32>
    %200 = arith.divf %198, %199 : vector<8x128xf32>
    %201 = arith.mulf %192, %170 : vector<8x128xf32>
    %202 = arith.mulf %186, %194 : vector<8x128xf32>
    %203 = arith.addf %201, %202 : vector<8x128xf32>
    %204 = math.tanh %203 : vector<8x128xf32>
    %205 = arith.mulf %200, %204 : vector<8x128xf32>
    %c6_i32 = arith.constant 6 : i32
    %206 = arith.index_cast %c6_i32 : i32 to index
    %c0_54 = arith.constant 0 : index
    %c0_55 = arith.constant 0 : index
    %207 = vector.load %arg2[%206, %c0_54, %c0_55] : memref<8x8x128xbf16, #tpu.memory_space<vmem>>, vector<1x8x128xbf16>
    %208 = vector.shape_cast %207 : vector<1x8x128xbf16> to vector<8x128xbf16>
    %209 = arith.truncf %205 : vector<8x128xf32> to vector<8x128xbf16>
    %210 = tpu.concatenate %208, %209 in 1 : vector<8x128xbf16>, vector<8x128xbf16> -> vector<8x256xbf16>
    %c0_56 = arith.constant 0 : index
    %c0_57 = arith.constant 0 : index
    %211 = vector.load %arg3[%c0_56, %c0_57] : memref<256x512xbf16, #tpu.memory_space<vmem>>, vector<256x512xbf16>
    %cst_58 = arith.constant dense<0.000000e+00> : vector<8x512xf32>
    %212 = tpu.matmul %210, %211, %cst_58 {dimension_numbers = #tpu.dot_dimension_numbers<[1], [0], [0], [1], [0, 0, 1, 1], [], []>} : vector<8x256xbf16>, vector<256x512xbf16>, vector<8x512xf32> -> vector<8x512xf32>
    %213 = arith.addf %212, %5 : vector<8x512xf32>
    %214 = vector.extract_strided_slice %213 {offsets = [0, 0], sizes = [8, 128], strides = [1, 1]} : vector<8x512xf32> to vector<8x128xf32>
    %215 = arith.negf %214 : vector<8x128xf32>
    %216 = math.exp %215 : vector<8x128xf32>
    %cst_59 = arith.constant 1.000000e+00 : f32
    %217 = vector.broadcast %cst_59 : f32 to vector<8x128xf32>
    %218 = arith.addf %217, %216 : vector<8x128xf32>
    %219 = arith.divf %217, %218 : vector<8x128xf32>
    %220 = vector.extract_strided_slice %213 {offsets = [0, 128], sizes = [8, 128], strides = [1, 1]} : vector<8x512xf32> to vector<8x128xf32>
    %221 = arith.negf %220 : vector<8x128xf32>
    %222 = math.exp %221 : vector<8x128xf32>
    %cst_60 = arith.constant 1.000000e+00 : f32
    %223 = vector.broadcast %cst_60 : f32 to vector<8x128xf32>
    %224 = arith.addf %223, %222 : vector<8x128xf32>
    %225 = arith.divf %223, %224 : vector<8x128xf32>
    %226 = vector.extract_strided_slice %213 {offsets = [0, 256], sizes = [8, 128], strides = [1, 1]} : vector<8x512xf32> to vector<8x128xf32>
    %227 = math.tanh %226 : vector<8x128xf32>
    %228 = vector.extract_strided_slice %213 {offsets = [0, 384], sizes = [8, 128], strides = [1, 1]} : vector<8x512xf32> to vector<8x128xf32>
    %229 = arith.negf %228 : vector<8x128xf32>
    %230 = math.exp %229 : vector<8x128xf32>
    %cst_61 = arith.constant 1.000000e+00 : f32
    %231 = vector.broadcast %cst_61 : f32 to vector<8x128xf32>
    %232 = arith.addf %231, %230 : vector<8x128xf32>
    %233 = arith.divf %231, %232 : vector<8x128xf32>
    %234 = arith.mulf %225, %203 : vector<8x128xf32>
    %235 = arith.mulf %219, %227 : vector<8x128xf32>
    %236 = arith.addf %234, %235 : vector<8x128xf32>
    %237 = math.tanh %236 : vector<8x128xf32>
    %238 = arith.mulf %233, %237 : vector<8x128xf32>
    %c7_i32 = arith.constant 7 : i32
    %239 = arith.index_cast %c7_i32 : i32 to index
    %c0_62 = arith.constant 0 : index
    %c0_63 = arith.constant 0 : index
    %240 = vector.load %arg2[%239, %c0_62, %c0_63] : memref<8x8x128xbf16, #tpu.memory_space<vmem>>, vector<1x8x128xbf16>
    %241 = vector.shape_cast %240 : vector<1x8x128xbf16> to vector<8x128xbf16>
    %242 = arith.truncf %238 : vector<8x128xf32> to vector<8x128xbf16>
    %243 = tpu.concatenate %241, %242 in 1 : vector<8x128xbf16>, vector<8x128xbf16> -> vector<8x256xbf16>
    %c0_64 = arith.constant 0 : index
    %c0_65 = arith.constant 0 : index
    %244 = vector.load %arg3[%c0_64, %c0_65] : memref<256x512xbf16, #tpu.memory_space<vmem>>, vector<256x512xbf16>
    %cst_66 = arith.constant dense<0.000000e+00> : vector<8x512xf32>
    %245 = tpu.matmul %243, %244, %cst_66 {dimension_numbers = #tpu.dot_dimension_numbers<[1], [0], [0], [1], [0, 0, 1, 1], [], []>} : vector<8x256xbf16>, vector<256x512xbf16>, vector<8x512xf32> -> vector<8x512xf32>
    %246 = arith.addf %245, %5 : vector<8x512xf32>
    %247 = vector.extract_strided_slice %246 {offsets = [0, 0], sizes = [8, 128], strides = [1, 1]} : vector<8x512xf32> to vector<8x128xf32>
    %248 = arith.negf %247 : vector<8x128xf32>
    %249 = math.exp %248 : vector<8x128xf32>
    %cst_67 = arith.constant 1.000000e+00 : f32
    %250 = vector.broadcast %cst_67 : f32 to vector<8x128xf32>
    %251 = arith.addf %250, %249 : vector<8x128xf32>
    %252 = arith.divf %250, %251 : vector<8x128xf32>
    %253 = vector.extract_strided_slice %246 {offsets = [0, 128], sizes = [8, 128], strides = [1, 1]} : vector<8x512xf32> to vector<8x128xf32>
    %254 = arith.negf %253 : vector<8x128xf32>
    %255 = math.exp %254 : vector<8x128xf32>
    %cst_68 = arith.constant 1.000000e+00 : f32
    %256 = vector.broadcast %cst_68 : f32 to vector<8x128xf32>
    %257 = arith.addf %256, %255 : vector<8x128xf32>
    %258 = arith.divf %256, %257 : vector<8x128xf32>
    %259 = vector.extract_strided_slice %246 {offsets = [0, 256], sizes = [8, 128], strides = [1, 1]} : vector<8x512xf32> to vector<8x128xf32>
    %260 = math.tanh %259 : vector<8x128xf32>
    %261 = vector.extract_strided_slice %246 {offsets = [0, 384], sizes = [8, 128], strides = [1, 1]} : vector<8x512xf32> to vector<8x128xf32>
    %262 = arith.negf %261 : vector<8x128xf32>
    %263 = math.exp %262 : vector<8x128xf32>
    %cst_69 = arith.constant 1.000000e+00 : f32
    %264 = vector.broadcast %cst_69 : f32 to vector<8x128xf32>
    %265 = arith.addf %264, %263 : vector<8x128xf32>
    %266 = arith.divf %264, %265 : vector<8x128xf32>
    %267 = arith.mulf %258, %236 : vector<8x128xf32>
    %268 = arith.mulf %252, %260 : vector<8x128xf32>
    %269 = arith.addf %267, %268 : vector<8x128xf32>
    %270 = math.tanh %269 : vector<8x128xf32>
    %271 = arith.mulf %266, %270 : vector<8x128xf32>
    %c8_i32 = arith.constant 8 : i32
    %c0_70 = arith.constant 0 : index
    %c0_71 = arith.constant 0 : index
    %272 = vector.load %arg8[%c0_70, %c0_71] : memref<8x128xf32, #tpu.memory_space<vmem>>, vector<8x128xf32>
    tpu.vector_store %arg8[%c0_70, %c0_71], %271 {strides = array<i32>} : memref<8x128xf32, #tpu.memory_space<vmem>>, vector<8x128xf32>,
    %c0_72 = arith.constant 0 : index
    %c0_73 = arith.constant 0 : index
    %273 = vector.load %arg9[%c0_72, %c0_73] : memref<8x128xf32, #tpu.memory_space<vmem>>, vector<8x128xf32>
    tpu.vector_store %arg9[%c0_72, %c0_73], %269 {strides = array<i32>} : memref<8x128xf32, #tpu.memory_space<vmem>>, vector<8x128xf32>,
    %c0_i32_74 = arith.constant 0 : i32
    %274 = arith.cmpi eq, %arg1, %c0_i32_74 : i32
    %275 = arith.extui %274 : i1 to i32
    %c0_i32_75 = arith.constant 0 : i32
    %276 = arith.cmpi ne, %275, %c0_i32_75 : i32
    scf.if %276 {
      %277 = arith.truncf %271 : vector<8x128xf32> to vector<8x128xbf16>
      %c0_76 = arith.constant 0 : index
      %c0_77 = arith.constant 0 : index
      %278 = vector.load %arg5[%c0_76, %c0_77] : memref<128x128xbf16, #tpu.memory_space<vmem>>, vector<128x128xbf16>
      %cst_78 = arith.constant dense<0.000000e+00> : vector<8x128xf32>
      %279 = tpu.matmul %277, %278, %cst_78 {dimension_numbers = #tpu.dot_dimension_numbers<[1], [0], [0], [1], [0, 0, 1, 1], [], []>} : vector<8x128xbf16>, vector<128x128xbf16>, vector<8x128xf32> -> vector<8x128xf32>
      %c0_79 = arith.constant 0 : index
      %c0_80 = arith.constant 0 : index
      %280 = vector.load %arg6[%c0_79, %c0_80] : memref<1x128xf32, #tpu.memory_space<vmem>>, vector<1x128xf32>
      %281 = vector.broadcast %280 : vector<1x128xf32> to vector<8x128xf32>
      %282 = arith.addf %279, %281 : vector<8x128xf32>
      %c0_81 = arith.constant 0 : index
      %c0_82 = arith.constant 0 : index
      %283 = vector.load %arg7[%c0_81, %c0_82] : memref<8x128xf32, #tpu.memory_space<vmem>>, vector<8x128xf32>
      tpu.vector_store %arg7[%c0_81, %c0_82], %282 {strides = array<i32>} : memref<8x128xf32, #tpu.memory_space<vmem>>, vector<8x128xf32>,
    } else {
    }
    return
  }
  func.func @transform_0(%arg0: i32, %arg1: i32) -> (i32, i32, i32) {
    %c0_i32 = arith.constant 0 : i32
    %c0_i32_0 = arith.constant 0 : i32
    return %arg1, %arg0, %c0_i32 : i32, i32, i32
  }
  func.func @transform_1(%arg0: i32, %arg1: i32) -> (i32, i32) {
    %c0_i32 = arith.constant 0 : i32
    %c0_i32_0 = arith.constant 0 : i32
    %c0_i32_1 = arith.constant 0 : i32
    return %c0_i32, %c0_i32_0 : i32, i32
  }
  func.func @transform_2(%arg0: i32, %arg1: i32) -> (i32, i32) {
    %c0_i32 = arith.constant 0 : i32
    %c0_i32_0 = arith.constant 0 : i32
    %c0_i32_1 = arith.constant 0 : i32
    return %c0_i32, %c0_i32_0 : i32, i32
  }
  func.func @transform_3(%arg0: i32, %arg1: i32) -> (i32, i32) {
    %c0_i32 = arith.constant 0 : i32
    %c0_i32_0 = arith.constant 0 : i32
    %c0_i32_1 = arith.constant 0 : i32
    return %c0_i32, %c0_i32_0 : i32, i32
  }
  func.func @transform_4(%arg0: i32, %arg1: i32) -> (i32, i32) {
    %c0_i32 = arith.constant 0 : i32
    %c0_i32_0 = arith.constant 0 : i32
    %c0_i32_1 = arith.constant 0 : i32
    return %c0_i32, %c0_i32_0 : i32, i32
  }
  func.func @transform_5(%arg0: i32, %arg1: i32) -> (i32, i32) {
    %c0_i32 = arith.constant 0 : i32
    %c0_i32_0 = arith.constant 0 : i32
    return %arg0, %c0_i32 : i32, i32
  }
}

</mosaic_0001>

<llo_original>
// kernel: rnn_forward.1
$region0: #{rnn_forward.1}
  #allocation0 [shape = 'u32[]', space=smem, size = 0x4, offset = 0x4, fixed_abs, tag = 'smem constant byte address 0x4 - core index']
  #allocation1 [shape = 'u32[72,128]{1,0:T(1,128)}', space=vmem, size = 0x9000, scoped, tag = 'internal scratch']
  #allocation2 [shape = 'f32[8,128]{1,0:T(8,128)}', space=vmem, size = 0x1000, scoped, tag = 'scratch operand']
  #allocation3 [shape = 'f32[8,128]{1,0:T(8,128)}', space=vmem, size = 0x1000, scoped, tag = 'scratch operand']
  %s0 = inlined_call_operand.vmem [shape: bf16[8,8,128], index: 0, kind: input, shape index: {}]
  %s1 = inlined_call_operand.vmem [shape: bf16[256,512], index: 1, kind: input, shape index: {}]
  %s2 = inlined_call_operand.vmem [shape: f32[1,512], index: 2, kind: input, shape index: {}]
  %s3 = inlined_call_operand.vmem [shape: bf16[128,128], index: 3, kind: input, shape index: {}]
  %s4 = inlined_call_operand.vmem [shape: f32[1,128], index: 4, kind: input, shape index: {}]
  %s5 = inlined_call_operand.vmem [shape: f32[8,128], index: 5, kind: output, shape index: {}]
  %s6 = sld [smem:[#allocation0]]
  $region38: #{rnn_forward.1} parent=0
    _
  %s8 = ssub.s32 1, %s6
  %s9 = scalar_select 0, %s8, %s6
  // Predicated region
  $region2: #{rnn_forward.1} parent=0 // pred_check
    _
  $region3: #{rnn_forward.1} parent=0 // pred_check_branch
    %11 = sbr.rel (0) target = $region5
  $region4: #{rnn_forward.1} parent=0 // pred_region
    _
  $region5: #{rnn_forward.1} parent=0 // pred_fallthru
    _
  // Predicated region
  $region6: #{rnn_forward.1} parent=0 // pred_check
    _
  $region7: #{rnn_forward.1} parent=0 // pred_check_branch
    %13 = sbr.rel (0) target = $region9
  $region8: #{rnn_forward.1} parent=0 // pred_region
    _
  $region9: #{rnn_forward.1} parent=0 // pred_fallthru
    _
  // Predicated region
  $region10: #{rnn_forward.1} parent=0 // pred_check
    _
  $region11: #{rnn_forward.1} parent=0 // pred_check_branch
    %15 = sbr.rel (0) target = $region13
  $region12: #{rnn_forward.1} parent=0 // pred_region
    _
  $region13: #{rnn_forward.1} parent=0 // pred_fallthru
    _
  // Predicated region
  $region14: #{rnn_forward.1} parent=0 // pred_check
    _
  $region15: #{rnn_forward.1} parent=0 // pred_check_branch
    %17 = sbr.rel (0) target = $region17
  $region16: #{rnn_forward.1} parent=0 // pred_region
    _
  $region17: #{rnn_forward.1} parent=0 // pred_fallthru
    _
  // Predicated region
  $region18: #{rnn_forward.1} parent=0 // pred_check
    _
  $region19: #{rnn_forward.1} parent=0 // pred_check_branch
    %19 = sbr.rel (0) target = $region21
  $region20: #{rnn_forward.1} parent=0 // pred_region
    _
  $region21: #{rnn_forward.1} parent=0 // pred_fallthru
    _
  %p20 = scmp.eq.s32.totalorder 0, 0
  // Predicated region
  $region22: #{rnn_forward.1} parent=0 // pred_check
    %p21 = pneg %p20
  $region23: #{rnn_forward.1} parent=0 // pred_check_branch
    %23 = sbr.rel (%p21) target = $region25
  $region24: #{rnn_forward.1} parent=0 // pred_region
    %24 = vst [vmem:[#allocation2] sm:$0xff] 0.0
    %25 = vst [vmem:[#allocation3] sm:$0xff] 0.0
  $region25: #{rnn_forward.1} parent=0 // pred_fallthru
    _
  %v26 = vld [vmem:[%s2] sm:$0xf]
  %v28 = vperm.slane %v26, 0
  %v29 = vperm.slane %v26, 1
  %v30 = vperm.slane %v26, 2
  %v31 = vperm.slane %v26, 3
  %v36 = vld [vmem:[#allocation2] sm:$0xff]
  %v37 = vld [vmem:[#allocation3] sm:$0xff]
  %v38 = vld [vmem:[%s0] sm:$0xf]
  %v39 = vpack.c.bf16 %v36, %v36
  %v40 = vld [vmem:[%s1] sm:$0xff]
  %v41 = vld [vmem:[%s1 + $0x8] sm:$0xff]
  %v42 = vld [vmem:[%s1 + $0x10] sm:$0xff]
  %v43 = vld [vmem:[%s1 + $0x18] sm:$0xff]
  %v44 = vld [vmem:[%s1 + $0x20] sm:$0xff]
  %v45 = vld [vmem:[%s1 + $0x28] sm:$0xff]
  %v46 = vld [vmem:[%s1 + $0x30] sm:$0xff]
  %v47 = vld [vmem:[%s1 + $0x38] sm:$0xff]
  %v48 = vld [vmem:[%s1 + $0x40] sm:$0xff]
  %v49 = vld [vmem:[%s1 + $0x48] sm:$0xff]
  %v50 = vld [vmem:[%s1 + $0x50] sm:$0xff]
  %v51 = vld [vmem:[%s1 + $0x58] sm:$0xff]
  %v52 = vld [vmem:[%s1 + $0x60] sm:$0xff]
  %v53 = vld [vmem:[%s1 + $0x68] sm:$0xff]
  %v54 = vld [vmem:[%s1 + $0x70] sm:$0xff]
  %v55 = vld [vmem:[%s1 + $0x78] sm:$0xff]
  %v56 = vld [vmem:[%s1 + $0x80] sm:$0xff]
  %v57 = vld [vmem:[%s1 + $0x88] sm:$0xff]
  %v58 = vld [vmem:[%s1 + $0x90] sm:$0xff]
  %v59 = vld [vmem:[%s1 + $0x98] sm:$0xff]
  %v60 = vld [vmem:[%s1 + $0xa0] sm:$0xff]
  %v61 = vld [vmem:[%s1 + $0xa8] sm:$0xff]
  %v62 = vld [vmem:[%s1 + $0xb0] sm:$0xff]
  %v63 = vld [vmem:[%s1 + $0xb8] sm:$0xff]
  %v64 = vld [vmem:[%s1 + $0xc0] sm:$0xff]
  %v65 = vld [vmem:[%s1 + $0xc8] sm:$0xff]
  %v66 = vld [vmem:[%s1 + $0xd0] sm:$0xff]
  %v67 = vld [vmem:[%s1 + $0xd8] sm:$0xff]
  %v68 = vld [vmem:[%s1 + $0xe0] sm:$0xff]
  %v69 = vld [vmem:[%s1 + $0xe8] sm:$0xff]
  %v70 = vld [vmem:[%s1 + $0xf0] sm:$0xff]
  %v71 = vld [vmem:[%s1 + $0xf8] sm:$0xff]
  %v72 = vld [vmem:[%s1 + $0x100] sm:$0xff]
  %v73 = vld [vmem:[%s1 + $0x108] sm:$0xff]
  %v74 = vld [vmem:[%s1 + $0x110] sm:$0xff]
  %v75 = vld [vmem:[%s1 + $0x118] sm:$0xff]
  %v76 = vld [vmem:[%s1 + $0x120] sm:$0xff]
  %v77 = vld [vmem:[%s1 + $0x128] sm:$0xff]
  %v78 = vld [vmem:[%s1 + $0x130] sm:$0xff]
  %v79 = vld [vmem:[%s1 + $0x138] sm:$0xff]
  %v80 = vld [vmem:[%s1 + $0x140] sm:$0xff]
  %v81 = vld [vmem:[%s1 + $0x148] sm:$0xff]
  %v82 = vld [vmem:[%s1 + $0x150] sm:$0xff]
  %v83 = vld [vmem:[%s1 + $0x158] sm:$0xff]
  %v84 = vld [vmem:[%s1 + $0x160] sm:$0xff]
  %v85 = vld [vmem:[%s1 + $0x168] sm:$0xff]
  %v86 = vld [vmem:[%s1 + $0x170] sm:$0xff]
  %v87 = vld [vmem:[%s1 + $0x178] sm:$0xff]
  %v88 = vld [vmem:[%s1 + $0x180] sm:$0xff]
  %v89 = vld [vmem:[%s1 + $0x188] sm:$0xff]
  %v90 = vld [vmem:[%s1 + $0x190] sm:$0xff]
  %v91 = vld [vmem:[%s1 + $0x198] sm:$0xff]
  %v92 = vld [vmem:[%s1 + $0x1a0] sm:$0xff]
  %v93 = vld [vmem:[%s1 + $0x1a8] sm:$0xff]
  %v94 = vld [vmem:[%s1 + $0x1b0] sm:$0xff]
  %v95 = vld [vmem:[%s1 + $0x1b8] sm:$0xff]
  %v96 = vld [vmem:[%s1 + $0x1c0] sm:$0xff]
  %v97 = vld [vmem:[%s1 + $0x1c8] sm:$0xff]
  %v98 = vld [vmem:[%s1 + $0x1d0] sm:$0xff]
  %v99 = vld [vmem:[%s1 + $0x1d8] sm:$0xff]
  %v100 = vld [vmem:[%s1 + $0x1e0] sm:$0xff]
  %v101 = vld [vmem:[%s1 + $0x1e8] sm:$0xff]
  %v102 = vld [vmem:[%s1 + $0x1f0] sm:$0xff]
  %v103 = vld [vmem:[%s1 + $0x1f8] sm:$0xff]
  %v168 = vunpack.c.l.b16 %v40
  %v169 = vunpack.c.h.b16 %v40
  %v170 = vunpack.c.l.b16 %v41
  %v171 = vunpack.c.h.b16 %v41
  %v172 = vunpack.c.l.b16 %v42
  %v173 = vunpack.c.h.b16 %v42
  %v174 = vunpack.c.l.b16 %v43
  %v175 = vunpack.c.h.b16 %v43
  %v176 = vunpack.c.l.b16 %v44
  %v177 = vunpack.c.h.b16 %v44
  %v178 = vunpack.c.l.b16 %v45
  %v179 = vunpack.c.h.b16 %v45
  %v180 = vunpack.c.l.b16 %v46
  %v181 = vunpack.c.h.b16 %v46
  %v182 = vunpack.c.l.b16 %v47
  %v183 = vunpack.c.h.b16 %v47
  %v184 = vunpack.c.l.b16 %v48
  %v185 = vunpack.c.h.b16 %v48
  %v186 = vunpack.c.l.b16 %v49
  %v187 = vunpack.c.h.b16 %v49
  %v188 = vunpack.c.l.b16 %v50
  %v189 = vunpack.c.h.b16 %v50
  %v190 = vunpack.c.l.b16 %v51
  %v191 = vunpack.c.h.b16 %v51
  %v192 = vunpack.c.l.b16 %v52
  %v193 = vunpack.c.h.b16 %v52
  %v194 = vunpack.c.l.b16 %v53
  %v195 = vunpack.c.h.b16 %v53
  %v196 = vunpack.c.l.b16 %v54
  %v197 = vunpack.c.h.b16 %v54
  %v198 = vunpack.c.l.b16 %v55
  %v199 = vunpack.c.h.b16 %v55
  %v200 = vunpack.c.l.b16 %v56
  %v201 = vunpack.c.h.b16 %v56
  %v202 = vunpack.c.l.b16 %v57
  %v203 = vunpack.c.h.b16 %v57
  %v204 = vunpack.c.l.b16 %v58
  %v205 = vunpack.c.h.b16 %v58
  %v206 = vunpack.c.l.b16 %v59
  %v207 = vunpack.c.h.b16 %v59
  %v208 = vunpack.c.l.b16 %v60
  %v209 = vunpack.c.h.b16 %v60
  %v210 = vunpack.c.l.b16 %v61
  %v211 = vunpack.c.h.b16 %v61
  %v212 = vunpack.c.l.b16 %v62
  %v213 = vunpack.c.h.b16 %v62
  %v214 = vunpack.c.l.b16 %v63
  %v215 = vunpack.c.h.b16 %v63
  %v216 = vunpack.c.l.b16 %v64
  %v217 = vunpack.c.h.b16 %v64
  %v218 = vunpack.c.l.b16 %v65
  %v219 = vunpack.c.h.b16 %v65
  %v220 = vunpack.c.l.b16 %v66
  %v221 = vunpack.c.h.b16 %v66
  %v222 = vunpack.c.l.b16 %v67
  %v223 = vunpack.c.h.b16 %v67
  %v224 = vunpack.c.l.b16 %v68
  %v225 = vunpack.c.h.b16 %v68
  %v226 = vunpack.c.l.b16 %v69
  %v227 = vunpack.c.h.b16 %v69
  %v228 = vunpack.c.l.b16 %v70
  %v229 = vunpack.c.h.b16 %v70
  %v230 = vunpack.c.l.b16 %v71
  %v231 = vunpack.c.h.b16 %v71
  %v232 = vunpack.c.l.b16 %v72
  %v233 = vunpack.c.h.b16 %v72
  %v234 = vunpack.c.l.b16 %v73
  %v235 = vunpack.c.h.b16 %v73
  %v236 = vunpack.c.l.b16 %v74
  %v237 = vunpack.c.h.b16 %v74
  %v238 = vunpack.c.l.b16 %v75
  %v239 = vunpack.c.h.b16 %v75
  %v240 = vunpack.c.l.b16 %v76
  %v241 = vunpack.c.h.b16 %v76
  %v242 = vunpack.c.l.b16 %v77
  %v243 = vunpack.c.h.b16 %v77
  %v244 = vunpack.c.l.b16 %v78
  %v245 = vunpack.c.h.b16 %v78
  %v246 = vunpack.c.l.b16 %v79
  %v247 = vunpack.c.h.b16 %v79
  %v248 = vunpack.c.l.b16 %v80
  %v249 = vunpack.c.h.b16 %v80
  %v250 = vunpack.c.l.b16 %v81
  %v251 = vunpack.c.h.b16 %v81
  %v252 = vunpack.c.l.b16 %v82
  %v253 = vunpack.c.h.b16 %v82
  %v254 = vunpack.c.l.b16 %v83
  %v255 = vunpack.c.h.b16 %v83
  %v256 = vunpack.c.l.b16 %v84
  %v257 = vunpack.c.h.b16 %v84
  %v258 = vunpack.c.l.b16 %v85
  %v259 = vunpack.c.h.b16 %v85
  %v260 = vunpack.c.l.b16 %v86
  %v261 = vunpack.c.h.b16 %v86
  %v262 = vunpack.c.l.b16 %v87
  %v263 = vunpack.c.h.b16 %v87
  %v264 = vunpack.c.l.b16 %v88
  %v265 = vunpack.c.h.b16 %v88
  %v266 = vunpack.c.l.b16 %v89
  %v267 = vunpack.c.h.b16 %v89
  %v268 = vunpack.c.l.b16 %v90
  %v269 = vunpack.c.h.b16 %v90
  %v270 = vunpack.c.l.b16 %v91
  %v271 = vunpack.c.h.b16 %v91
  %v272 = vunpack.c.l.b16 %v92
  %v273 = vunpack.c.h.b16 %v92
  %v274 = vunpack.c.l.b16 %v93
  %v275 = vunpack.c.h.b16 %v93
  %v276 = vunpack.c.l.b16 %v94
  %v277 = vunpack.c.h.b16 %v94
  %v278 = vunpack.c.l.b16 %v95
  %v279 = vunpack.c.h.b16 %v95
  %v280 = vunpack.c.l.b16 %v96
  %v281 = vunpack.c.h.b16 %v96
  %v282 = vunpack.c.l.b16 %v97
  %v283 = vunpack.c.h.b16 %v97
  %v284 = vunpack.c.l.b16 %v98
  %v285 = vunpack.c.h.b16 %v98
  %v286 = vunpack.c.l.b16 %v99
  %v287 = vunpack.c.h.b16 %v99
  %v288 = vunpack.c.l.b16 %v100
  %v289 = vunpack.c.h.b16 %v100
  %v290 = vunpack.c.l.b16 %v101
  %v291 = vunpack.c.h.b16 %v101
  %v292 = vunpack.c.l.b16 %v102
  %v293 = vunpack.c.h.b16 %v102
  %v294 = vunpack.c.l.b16 %v103
  %v295 = vunpack.c.h.b16 %v103
  %v296 = vpack.c.b16 %v172, %v168
  %v297 = vpack.c.b16 %v173, %v169
  %v298 = vpack.c.b16 %v174, %v170
  %v299 = vpack.c.b16 %v175, %v171
  %v300 = vpack.c.b16 %v180, %v176
  %v301 = vpack.c.b16 %v181, %v177
  %v302 = vpack.c.b16 %v182, %v178
  %v303 = vpack.c.b16 %v183, %v179
  %v304 = vpack.c.b16 %v188, %v184
  %v305 = vpack.c.b16 %v189, %v185
  %v306 = vpack.c.b16 %v190, %v186
  %v307 = vpack.c.b16 %v191, %v187
  %v308 = vpack.c.b16 %v196, %v192
  %v309 = vpack.c.b16 %v197, %v193
  %v310 = vpack.c.b16 %v198, %v194
  %v311 = vpack.c.b16 %v199, %v195
  %v312 = vpack.c.b16 %v204, %v200
  %v313 = vpack.c.b16 %v205, %v201
  %v314 = vpack.c.b16 %v206, %v202
  %v315 = vpack.c.b16 %v207, %v203
  %v316 = vpack.c.b16 %v212, %v208
  %v317 = vpack.c.b16 %v213, %v209
  %v318 = vpack.c.b16 %v214, %v210
  %v319 = vpack.c.b16 %v215, %v211
  %v320 = vpack.c.b16 %v220, %v216
  %v321 = vpack.c.b16 %v221, %v217
  %v322 = vpack.c.b16 %v222, %v218
  %v323 = vpack.c.b16 %v223, %v219
  %v324 = vpack.c.b16 %v228, %v224
  %v325 = vpack.c.b16 %v229, %v225
  %v326 = vpack.c.b16 %v230, %v226
  %v327 = vpack.c.b16 %v231, %v227
  %v328 = vpack.c.b16 %v236, %v232
  %v329 = vpack.c.b16 %v237, %v233
  %v330 = vpack.c.b16 %v238, %v234
  %v331 = vpack.c.b16 %v239, %v235
  %v332 = vpack.c.b16 %v244, %v240
  %v333 = vpack.c.b16 %v245, %v241
  %v334 = vpack.c.b16 %v246, %v242
  %v335 = vpack.c.b16 %v247, %v243
  %v336 = vpack.c.b16 %v252, %v248
  %v337 = vpack.c.b16 %v253, %v249
  %v338 = vpack.c.b16 %v254, %v250
  %v339 = vpack.c.b16 %v255, %v251
  %v340 = vpack.c.b16 %v260, %v256
  %v341 = vpack.c.b16 %v261, %v257
  %v342 = vpack.c.b16 %v262, %v258
  %v343 = vpack.c.b16 %v263, %v259
  %v344 = vpack.c.b16 %v268, %v264
  %v345 = vpack.c.b16 %v269, %v265
  %v346 = vpack.c.b16 %v270, %v266
  %v347 = vpack.c.b16 %v271, %v267
  %v348 = vpack.c.b16 %v276, %v272
  %v349 = vpack.c.b16 %v277, %v273
  %v350 = vpack.c.b16 %v278, %v274
  %v351 = vpack.c.b16 %v279, %v275
  %v352 = vpack.c.b16 %v284, %v280
  %v353 = vpack.c.b16 %v285, %v281
  %v354 = vpack.c.b16 %v286, %v282
  %v355 = vpack.c.b16 %v287, %v283
  %v356 = vpack.c.b16 %v292, %v288
  %v357 = vpack.c.b16 %v293, %v289
  %v358 = vpack.c.b16 %v294, %v290
  %v359 = vpack.c.b16 %v295, %v291
  %424 = vmatpush.bf16.msra.mxu0 %v324
  %425 = vmatpush.bf16.msra.mxu0 %v320
  %426 = vmatpush.bf16.msra.mxu0 %v316
  %427 = vmatpush.bf16.msra.mxu0 %v312
  %428 = vmatpush.bf16.msra.mxu0 %v308
  %429 = vmatpush.bf16.msra.mxu0 %v304
  %430 = vmatpush.bf16.msra.mxu0 %v300
  %431 = vmatpush.bf16.msra.mxu0 %v296
  %432 = vmatmul.bf16.gmra.mxu0 %v38
  %v433 = vpop.f32.mrf.mxu0
  %v434 = vadd.f32 %v28, %v433
  %v435 = vpop.f32.mrf.mxu0
  %436 = vdwg.mxu0
  %437 = vmatpush.bf16.msra.mxu0 %v356
  %438 = vmatpush.bf16.msra.mxu0 %v352
  %439 = vmatpush.bf16.msra.mxu0 %v348
  %440 = vmatpush.bf16.msra.mxu0 %v344
  %441 = vmatpush.bf16.msra.mxu0 %v340
  %442 = vmatpush.bf16.msra.mxu0 %v336
  %443 = vmatpush.bf16.msra.mxu0 %v332
  %444 = vmatpush.bf16.msra.mxu0 %v328
  %445 = vmatmul.bf16.gmra.mxu0 %v39
  %v446 = vpop.f32.mrf.mxu0
  %v447 = vadd.f32 %v434, %v446
  %v448 = vpop.f32.mrf.mxu0
  %449 = vdwg.mxu0
  %450 = vmatpush.bf16.msra.mxu0 %v325
  %451 = vmatpush.bf16.msra.mxu0 %v321
  %452 = vmatpush.bf16.msra.mxu0 %v317
  %453 = vmatpush.bf16.msra.mxu0 %v313
  %454 = vmatpush.bf16.msra.mxu0 %v309
  %455 = vmatpush.bf16.msra.mxu0 %v305
  %456 = vmatpush.bf16.msra.mxu0 %v301
  %457 = vmatpush.bf16.msra.mxu0 %v297
  %458 = vmatmul.bf16.gmra.mxu0 %v38
  %v459 = vpop.f32.mrf.mxu0
  %v460 = vadd.f32 %v29, %v459
  %v461 = vpop.f32.mrf.mxu0
  %462 = vdwg.mxu0
  %463 = vmatpush.bf16.msra.mxu0 %v357
  %464 = vmatpush.bf16.msra.mxu0 %v353
  %465 = vmatpush.bf16.msra.mxu0 %v349
  %466 = vmatpush.bf16.msra.mxu0 %v345
  %467 = vmatpush.bf16.msra.mxu0 %v341
  %468 = vmatpush.bf16.msra.mxu0 %v337
  %469 = vmatpush.bf16.msra.mxu0 %v333
  %470 = vmatpush.bf16.msra.mxu0 %v329
  %471 = vmatmul.bf16.gmra.mxu0 %v39
  %v472 = vpop.f32.mrf.mxu0
  %v473 = vadd.f32 %v460, %v472
  %v474 = vpop.f32.mrf.mxu0
  %475 = vdwg.mxu0
  %476 = vmatpush.bf16.msra.mxu0 %v326
  %477 = vmatpush.bf16.msra.mxu0 %v322
  %478 = vmatpush.bf16.msra.mxu0 %v318
  %479 = vmatpush.bf16.msra.mxu0 %v314
  %480 = vmatpush.bf16.msra.mxu0 %v310
  %481 = vmatpush.bf16.msra.mxu0 %v306
  %482 = vmatpush.bf16.msra.mxu0 %v302
  %483 = vmatpush.bf16.msra.mxu0 %v298
  %484 = vmatmul.bf16.gmra.mxu0 %v38
  %v485 = vpop.f32.mrf.mxu0
  %v486 = vadd.f32 %v30, %v485
  %v487 = vpop.f32.mrf.mxu0
  %488 = vdwg.mxu0
  %489 = vmatpush.bf16.msra.mxu0 %v358
  %490 = vmatpush.bf16.msra.mxu0 %v354
  %491 = vmatpush.bf16.msra.mxu0 %v350
  %492 = vmatpush.bf16.msra.mxu0 %v346
  %493 = vmatpush.bf16.msra.mxu0 %v342
  %494 = vmatpush.bf16.msra.mxu0 %v338
  %495 = vmatpush.bf16.msra.mxu0 %v334
  %496 = vmatpush.bf16.msra.mxu0 %v330
  %497 = vmatmul.bf16.gmra.mxu0 %v39
  %v498 = vpop.f32.mrf.mxu0
  %v499 = vadd.f32 %v486, %v498
  %v500 = vpop.f32.mrf.mxu0
  %501 = vdwg.mxu0
  %502 = vmatpush.bf16.msra.mxu0 %v327
  %503 = vmatpush.bf16.msra.mxu0 %v323
  %504 = vmatpush.bf16.msra.mxu0 %v319
  %505 = vmatpush.bf16.msra.mxu0 %v315
  %506 = vmatpush.bf16.msra.mxu0 %v311
  %507 = vmatpush.bf16.msra.mxu0 %v307
  %508 = vmatpush.bf16.msra.mxu0 %v303
  %509 = vmatpush.bf16.msra.mxu0 %v299
  %510 = vmatmul.bf16.gmra.mxu0 %v38
  %v511 = vpop.f32.mrf.mxu0
  %v512 = vadd.f32 %v31, %v511
  %v513 = vpop.f32.mrf.mxu0
  %514 = vdwg.mxu0
  %515 = vmatpush.bf16.msra.mxu0 %v359
  %516 = vmatpush.bf16.msra.mxu0 %v355
  %517 = vmatpush.bf16.msra.mxu0 %v351
  %518 = vmatpush.bf16.msra.mxu0 %v347
  %519 = vmatpush.bf16.msra.mxu0 %v343
  %520 = vmatpush.bf16.msra.mxu0 %v339
  %521 = vmatpush.bf16.msra.mxu0 %v335
  %522 = vmatpush.bf16.msra.mxu0 %v331
  %523 = vmatmul.bf16.gmra.mxu0 %v39
  %v524 = vpop.f32.mrf.mxu0
  %v525 = vadd.f32 %v512, %v524
  %v526 = vpop.f32.mrf.mxu0
  %527 = vdwg.mxu0
  %v528 = vxor.u32 %v447, 2147483648
  %v529 = vmul.f32 %v528, 1.442695
  %v530 = vpow.pop %v529
  %v531 = vadd.f32 %v530, 1.0
  %v532 = vrcp.pop %v531
  %v533 = vmul.f32 %v531, %v532
  %v534 = vsub.f32 1.0, %v533
  %v535 = vmul.f32 %v532, %v534
  %v536 = vadd.f32 %v532, %v535
  %vm537 = vweird.f32 %v531
  %vm538 = vweird.f32 %v532
  %vm539 = vmor %vm537, %vm538
  %v540 = vsel %vm539, %v532, %v536
  %v541 = vand.u32 2147483647, %v531
  %vm542 = vcmp.eq.f32.partialorder %v541, 8.507059e+37
  %v543 = vand.u32 %v531, 2147483648
  %v544 = vor.u32 1.1754944e-38, %v543
  %v545 = vsel %vm542, %v544, %v540
  %v546 = vmul.f32 1.0, %v545
  %v547 = vxor.u32 %v473, 2147483648
  %v548 = vmul.f32 %v547, 1.442695
  %v549 = vpow.pop %v548
  %v550 = vadd.f32 %v549, 1.0
  %v551 = vrcp.pop %v550
  %v552 = vmul.f32 %v550, %v551
  %v553 = vsub.f32 1.0, %v552
  %v554 = vmul.f32 %v551, %v553
  %v555 = vadd.f32 %v551, %v554
  %vm556 = vweird.f32 %v550
  %vm557 = vweird.f32 %v551
  %vm558 = vmor %vm556, %vm557
  %v559 = vsel %vm558, %v551, %v555
  %v560 = vand.u32 2147483647, %v550
  %vm561 = vcmp.eq.f32.partialorder %v560, 8.507059e+37
  %v562 = vand.u32 %v550, 2147483648
  %v563 = vor.u32 1.1754944e-38, %v562
  %v564 = vsel %vm561, %v563, %v559
  %v565 = vmul.f32 1.0, %v564
  %v566 = vtanh.pop %v499
  %v567 = vxor.u32 %v525, 2147483648
  %v568 = vmul.f32 %v567, 1.442695
  %v569 = vpow.pop %v568
  %v570 = vadd.f32 %v569, 1.0
  %v571 = vrcp.pop %v570
  %v572 = vmul.f32 %v570, %v571
  %v573 = vsub.f32 1.0, %v572
  %v574 = vmul.f32 %v571, %v573
  %v575 = vadd.f32 %v571, %v574
  %vm576 = vweird.f32 %v570
  %vm577 = vweird.f32 %v571
  %vm578 = vmor %vm576, %vm577
  %v579 = vsel %vm578, %v571, %v575
  %v580 = vand.u32 2147483647, %v570
  %vm581 = vcmp.eq.f32.partialorder %v580, 8.507059e+37
  %v582 = vand.u32 %v570, 2147483648
  %v583 = vor.u32 1.1754944e-38, %v582
  %v584 = vsel %vm581, %v583, %v579
  %v585 = vmul.f32 1.0, %v584
  %v586 = vmul.f32 %v565, %v37
  %v587 = vmul.f32 %v546, %v566
  %v588 = vadd.f32 %v586, %v587
  %v589 = vtanh.pop %v588
  %v590 = vmul.f32 %v585, %v589
  %s591 = scalar_lea.vmem %s0, 4
  %v592 = vld [vmem:[%s591] sm:$0xf]
  %v593 = vpack.c.bf16 %v590, %v590
  %594 = vmatpush.bf16.msra.mxu0 %v324
  %595 = vmatpush.bf16.msra.mxu0 %v320
  %596 = vmatpush.bf16.msra.mxu0 %v316
  %597 = vmatpush.bf16.msra.mxu0 %v312
  %598 = vmatpush.bf16.msra.mxu0 %v308
  %599 = vmatpush.bf16.msra.mxu0 %v304
  %600 = vmatpush.bf16.msra.mxu0 %v300
  %601 = vmatpush.bf16.msra.mxu0 %v296
  %602 = vmatmul.bf16.gmra.mxu0 %v592
  %v603 = vpop.f32.mrf.mxu0
  %v604 = vadd.f32 %v28, %v603
  %v605 = vpop.f32.mrf.mxu0
  %606 = vdwg.mxu0
  %607 = vmatpush.bf16.msra.mxu0 %v356
  %608 = vmatpush.bf16.msra.mxu0 %v352
  %609 = vmatpush.bf16.msra.mxu0 %v348
  %610 = vmatpush.bf16.msra.mxu0 %v344
  %611 = vmatpush.bf16.msra.mxu0 %v340
  %612 = vmatpush.bf16.msra.mxu0 %v336
  %613 = vmatpush.bf16.msra.mxu0 %v332
  %614 = vmatpush.bf16.msra.mxu0 %v328
  %615 = vmatmul.bf16.gmra.mxu0 %v593
  %v616 = vpop.f32.mrf.mxu0
  %v617 = vadd.f32 %v604, %v616
  %v618 = vpop.f32.mrf.mxu0
  %619 = vdwg.mxu0
  %620 = vmatpush.bf16.msra.mxu0 %v325
  %621 = vmatpush.bf16.msra.mxu0 %v321
  %622 = vmatpush.bf16.msra.mxu0 %v317
  %623 = vmatpush.bf16.msra.mxu0 %v313
  %624 = vmatpush.bf16.msra.mxu0 %v309
  %625 = vmatpush.bf16.msra.mxu0 %v305
  %626 = vmatpush.bf16.msra.mxu0 %v301
  %627 = vmatpush.bf16.msra.mxu0 %v297
  %628 = vmatmul.bf16.gmra.mxu0 %v592
  %v629 = vpop.f32.mrf.mxu0
  %v630 = vadd.f32 %v29, %v629
  %v631 = vpop.f32.mrf.mxu0
  %632 = vdwg.mxu0
  %633 = vmatpush.bf16.msra.mxu0 %v357
  %634 = vmatpush.bf16.msra.mxu0 %v353
  %635 = vmatpush.bf16.msra.mxu0 %v349
  %636 = vmatpush.bf16.msra.mxu0 %v345
  %637 = vmatpush.bf16.msra.mxu0 %v341
  %638 = vmatpush.bf16.msra.mxu0 %v337
  %639 = vmatpush.bf16.msra.mxu0 %v333
  %640 = vmatpush.bf16.msra.mxu0 %v329
  %641 = vmatmul.bf16.gmra.mxu0 %v593
  %v642 = vpop.f32.mrf.mxu0
  %v643 = vadd.f32 %v630, %v642
  %v644 = vpop.f32.mrf.mxu0
  %645 = vdwg.mxu0
  %646 = vmatpush.bf16.msra.mxu0 %v326
  %647 = vmatpush.bf16.msra.mxu0 %v322
  %648 = vmatpush.bf16.msra.mxu0 %v318
  %649 = vmatpush.bf16.msra.mxu0 %v314
  %650 = vmatpush.bf16.msra.mxu0 %v310
  %651 = vmatpush.bf16.msra.mxu0 %v306
  %652 = vmatpush.bf16.msra.mxu0 %v302
  %653 = vmatpush.bf16.msra.mxu0 %v298
  %654 = vmatmul.bf16.gmra.mxu0 %v592
  %v655 = vpop.f32.mrf.mxu0
  %v656 = vadd.f32 %v30, %v655
  %v657 = vpop.f32.mrf.mxu0
  %658 = vdwg.mxu0
  %659 = vmatpush.bf16.msra.mxu0 %v358
  %660 = vmatpush.bf16.msra.mxu0 %v354
  %661 = vmatpush.bf16.msra.mxu0 %v350
  %662 = vmatpush.bf16.msra.mxu0 %v346
  %663 = vmatpush.bf16.msra.mxu0 %v342
  %664 = vmatpush.bf16.msra.mxu0 %v338
  %665 = vmatpush.bf16.msra.mxu0 %v334
  %666 = vmatpush.bf16.msra.mxu0 %v330
  %667 = vmatmul.bf16.gmra.mxu0 %v593
  %v668 = vpop.f32.mrf.mxu0
  %v669 = vadd.f32 %v656, %v668
  %v670 = vpop.f32.mrf.mxu0
  %671 = vdwg.mxu0
  %672 = vmatpush.bf16.msra.mxu0 %v327
  %673 = vmatpush.bf16.msra.mxu0 %v323
  %674 = vmatpush.bf16.msra.mxu0 %v319
  %675 = vmatpush.bf16.msra.mxu0 %v315
  %676 = vmatpush.bf16.msra.mxu0 %v311
  %677 = vmatpush.bf16.msra.mxu0 %v307
  %678 = vmatpush.bf16.msra.mxu0 %v303
  %679 = vmatpush.bf16.msra.mxu0 %v299
  %680 = vmatmul.bf16.gmra.mxu0 %v592
  %v681 = vpop.f32.mrf.mxu0
  %v682 = vadd.f32 %v31, %v681
  %v683 = vpop.f32.mrf.mxu0
  %684 = vdwg.mxu0
  %685 = vmatpush.bf16.msra.mxu0 %v359
  %686 = vmatpush.bf16.msra.mxu0 %v355
  %687 = vmatpush.bf16.msra.mxu0 %v351
  %688 = vmatpush.bf16.msra.mxu0 %v347
  %689 = vmatpush.bf16.msra.mxu0 %v343
  %690 = vmatpush.bf16.msra.mxu0 %v339
  %691 = vmatpush.bf16.msra.mxu0 %v335
  %692 = vmatpush.bf16.msra.mxu0 %v331
  %693 = vmatmul.bf16.gmra.mxu0 %v593
  %v694 = vpop.f32.mrf.mxu0
  %v695 = vadd.f32 %v682, %v694
  %v696 = vpop.f32.mrf.mxu0
  %697 = vdwg.mxu0
  %v698 = vxor.u32 %v617, 2147483648
  %v699 = vmul.f32 %v698, 1.442695
  %v700 = vpow.pop %v699
  %v701 = vadd.f32 %v700, 1.0
  %v702 = vrcp.pop %v701
  %v703 = vmul.f32 %v701, %v702
  %v704 = vsub.f32 1.0, %v703
  %v705 = vmul.f32 %v702, %v704
  %v706 = vadd.f32 %v702, %v705
  %vm707 = vweird.f32 %v701
  %vm708 = vweird.f32 %v702
  %vm709 = vmor %vm707, %vm708
  %v710 = vsel %vm709, %v702, %v706
  %v711 = vand.u32 2147483647, %v701
  %vm712 = vcmp.eq.f32.partialorder %v711, 8.507059e+37
  %v713 = vand.u32 %v701, 2147483648
  %v714 = vor.u32 1.1754944e-38, %v713
  %v715 = vsel %vm712, %v714, %v710
  %v716 = vmul.f32 1.0, %v715
  %v717 = vxor.u32 %v643, 2147483648
  %v718 = vmul.f32 %v717, 1.442695
  %v719 = vpow.pop %v718
  %v720 = vadd.f32 %v719, 1.0
  %v721 = vrcp.pop %v720
  %v722 = vmul.f32 %v720, %v721
  %v723 = vsub.f32 1.0, %v722
  %v724 = vmul.f32 %v721, %v723
  %v725 = vadd.f32 %v721, %v724
  %vm726 = vweird.f32 %v720
  %vm727 = vweird.f32 %v721
  %vm728 = vmor %vm726, %vm727
  %v729 = vsel %vm728, %v721, %v725
  %v730 = vand.u32 2147483647, %v720
  %vm731 = vcmp.eq.f32.partialorder %v730, 8.507059e+37
  %v732 = vand.u32 %v720, 2147483648
  %v733 = vor.u32 1.1754944e-38, %v732
  %v734 = vsel %vm731, %v733, %v729
  %v735 = vmul.f32 1.0, %v734
  %v736 = vtanh.pop %v669
  %v737 = vxor.u32 %v695, 2147483648
  %v738 = vmul.f32 %v737, 1.442695
  %v739 = vpow.pop %v738
  %v740 = vadd.f32 %v739, 1.0
  %v741 = vrcp.pop %v740
  %v742 = vmul.f32 %v740, %v741
  %v743 = vsub.f32 1.0, %v742
  %v744 = vmul.f32 %v741, %v743
  %v745 = vadd.f32 %v741, %v744
  %vm746 = vweird.f32 %v740
  %vm747 = vweird.f32 %v741
  %vm748 = vmor %vm746, %vm747
  %v749 = vsel %vm748, %v741, %v745
  %v750 = vand.u32 2147483647, %v740
  %vm751 = vcmp.eq.f32.partialorder %v750, 8.507059e+37
  %v752 = vand.u32 %v740, 2147483648
  %v753 = vor.u32 1.1754944e-38, %v752
  %v754 = vsel %vm751, %v753, %v749
  %v755 = vmul.f32 1.0, %v754
  %v756 = vmul.f32 %v735, %v588
  %v757 = vmul.f32 %v716, %v736
  %v758 = vadd.f32 %v756, %v757
  %v759 = vtanh.pop %v758
  %v760 = vmul.f32 %v755, %v759
  %s761 = scalar_lea.vmem %s0, 8
  %v762 = vld [vmem:[%s761] sm:$0xf]
  %v763 = vpack.c.bf16 %v760, %v760
  %764 = vmatpush.bf16.msra.mxu0 %v324
  %765 = vmatpush.bf16.msra.mxu0 %v320
  %766 = vmatpush.bf16.msra.mxu0 %v316
  %767 = vmatpush.bf16.msra.mxu0 %v312
  %768 = vmatpush.bf16.msra.mxu0 %v308
  %769 = vmatpush.bf16.msra.mxu0 %v304
  %770 = vmatpush.bf16.msra.mxu0 %v300
  %771 = vmatpush.bf16.msra.mxu0 %v296
  %772 = vmatmul.bf16.gmra.mxu0 %v762
  %v773 = vpop.f32.mrf.mxu0
  %v774 = vadd.f32 %v28, %v773
  %v775 = vpop.f32.mrf.mxu0
  %776 = vdwg.mxu0
  %777 = vmatpush.bf16.msra.mxu0 %v356
  %778 = vmatpush.bf16.msra.mxu0 %v352
  %779 = vmatpush.bf16.msra.mxu0 %v348
  %780 = vmatpush.bf16.msra.mxu0 %v344
  %781 = vmatpush.bf16.msra.mxu0 %v340
  %782 = vmatpush.bf16.msra.mxu0 %v336
  %783 = vmatpush.bf16.msra.mxu0 %v332
  %784 = vmatpush.bf16.msra.mxu0 %v328
  %785 = vmatmul.bf16.gmra.mxu0 %v763
  %v786 = vpop.f32.mrf.mxu0
  %v787 = vadd.f32 %v774, %v786
  %v788 = vpop.f32.mrf.mxu0
  %789 = vdwg.mxu0
  %790 = vmatpush.bf16.msra.mxu0 %v325
  %791 = vmatpush.bf16.msra.mxu0 %v321
  %792 = vmatpush.bf16.msra.mxu0 %v317
  %793 = vmatpush.bf16.msra.mxu0 %v313
  %794 = vmatpush.bf16.msra.mxu0 %v309
  %795 = vmatpush.bf16.msra.mxu0 %v305
  %796 = vmatpush.bf16.msra.mxu0 %v301
  %797 = vmatpush.bf16.msra.mxu0 %v297
  %798 = vmatmul.bf16.gmra.mxu0 %v762
  %v799 = vpop.f32.mrf.mxu0
  %v800 = vadd.f32 %v29, %v799
  %v801 = vpop.f32.mrf.mxu0
  %802 = vdwg.mxu0
  %803 = vmatpush.bf16.msra.mxu0 %v357
  %804 = vmatpush.bf16.msra.mxu0 %v353
  %805 = vmatpush.bf16.msra.mxu0 %v349
  %806 = vmatpush.bf16.msra.mxu0 %v345
  %807 = vmatpush.bf16.msra.mxu0 %v341
  %808 = vmatpush.bf16.msra.mxu0 %v337
  %809 = vmatpush.bf16.msra.mxu0 %v333
  %810 = vmatpush.bf16.msra.mxu0 %v329
  %811 = vmatmul.bf16.gmra.mxu0 %v763
  %v812 = vpop.f32.mrf.mxu0
  %v813 = vadd.f32 %v800, %v812
  %v814 = vpop.f32.mrf.mxu0
  %815 = vdwg.mxu0
  %816 = vmatpush.bf16.msra.mxu0 %v326
  %817 = vmatpush.bf16.msra.mxu0 %v322
  %818 = vmatpush.bf16.msra.mxu0 %v318
  %819 = vmatpush.bf16.msra.mxu0 %v314
  %820 = vmatpush.bf16.msra.mxu0 %v310
  %821 = vmatpush.bf16.msra.mxu0 %v306
  %822 = vmatpush.bf16.msra.mxu0 %v302
  %823 = vmatpush.bf16.msra.mxu0 %v298
  %824 = vmatmul.bf16.gmra.mxu0 %v762
  %v825 = vpop.f32.mrf.mxu0
  %v826 = vadd.f32 %v30, %v825
  %v827 = vpop.f32.mrf.mxu0
  %828 = vdwg.mxu0
  %829 = vmatpush.bf16.msra.mxu0 %v358
  %830 = vmatpush.bf16.msra.mxu0 %v354
  %831 = vmatpush.bf16.msra.mxu0 %v350
  %832 = vmatpush.bf16.msra.mxu0 %v346
  %833 = vmatpush.bf16.msra.mxu0 %v342
  %834 = vmatpush.bf16.msra.mxu0 %v338
  %835 = vmatpush.bf16.msra.mxu0 %v334
  %836 = vmatpush.bf16.msra.mxu0 %v330
  %837 = vmatmul.bf16.gmra.mxu0 %v763
  %v838 = vpop.f32.mrf.mxu0
  %v839 = vadd.f32 %v826, %v838
  %v840 = vpop.f32.mrf.mxu0
  %841 = vdwg.mxu0
  %842 = vmatpush.bf16.msra.mxu0 %v327
  %843 = vmatpush.bf16.msra.mxu0 %v323
  %844 = vmatpush.bf16.msra.mxu0 %v319
  %845 = vmatpush.bf16.msra.mxu0 %v315
  %846 = vmatpush.bf16.msra.mxu0 %v311
  %847 = vmatpush.bf16.msra.mxu0 %v307
  %848 = vmatpush.bf16.msra.mxu0 %v303
  %849 = vmatpush.bf16.msra.mxu0 %v299
  %850 = vmatmul.bf16.gmra.mxu0 %v762
  %v851 = vpop.f32.mrf.mxu0
  %v852 = vadd.f32 %v31, %v851
  %v853 = vpop.f32.mrf.mxu0
  %854 = vdwg.mxu0
  %855 = vmatpush.bf16.msra.mxu0 %v359
  %856 = vmatpush.bf16.msra.mxu0 %v355
  %857 = vmatpush.bf16.msra.mxu0 %v351
  %858 = vmatpush.bf16.msra.mxu0 %v347
  %859 = vmatpush.bf16.msra.mxu0 %v343
  %860 = vmatpush.bf16.msra.mxu0 %v339
  %861 = vmatpush.bf16.msra.mxu0 %v335
  %862 = vmatpush.bf16.msra.mxu0 %v331
  %863 = vmatmul.bf16.gmra.mxu0 %v763
  %v864 = vpop.f32.mrf.mxu0
  %v865 = vadd.f32 %v852, %v864
  %v866 = vpop.f32.mrf.mxu0
  %867 = vdwg.mxu0
  %v868 = vxor.u32 %v787, 2147483648
  %v869 = vmul.f32 %v868, 1.442695
  %v870 = vpow.pop %v869
  %v871 = vadd.f32 %v870, 1.0
  %v872 = vrcp.pop %v871
  %v873 = vmul.f32 %v871, %v872
  %v874 = vsub.f32 1.0, %v873
  %v875 = vmul.f32 %v872, %v874
  %v876 = vadd.f32 %v872, %v875
  %vm877 = vweird.f32 %v871
  %vm878 = vweird.f32 %v872
  %vm879 = vmor %vm877, %vm878
  %v880 = vsel %vm879, %v872, %v876
  %v881 = vand.u32 2147483647, %v871
  %vm882 = vcmp.eq.f32.partialorder %v881, 8.507059e+37
  %v883 = vand.u32 %v871, 2147483648
  %v884 = vor.u32 1.1754944e-38, %v883
  %v885 = vsel %vm882, %v884, %v880
  %v886 = vmul.f32 1.0, %v885
  %v887 = vxor.u32 %v813, 2147483648
  %v888 = vmul.f32 %v887, 1.442695
  %v889 = vpow.pop %v888
  %v890 = vadd.f32 %v889, 1.0
  %v891 = vrcp.pop %v890
  %v892 = vmul.f32 %v890, %v891
  %v893 = vsub.f32 1.0, %v892
  %v894 = vmul.f32 %v891, %v893
  %v895 = vadd.f32 %v891, %v894
  %vm896 = vweird.f32 %v890
  %vm897 = vweird.f32 %v891
  %vm898 = vmor %vm896, %vm897
  %v899 = vsel %vm898, %v891, %v895
  %v900 = vand.u32 2147483647, %v890
  %vm901 = vcmp.eq.f32.partialorder %v900, 8.507059e+37
  %v902 = vand.u32 %v890, 2147483648
  %v903 = vor.u32 1.1754944e-38, %v902
  %v904 = vsel %vm901, %v903, %v899
  %v905 = vmul.f32 1.0, %v904
  %v906 = vtanh.pop %v839
  %v907 = vxor.u32 %v865, 2147483648
  %v908 = vmul.f32 %v907, 1.442695
  %v909 = vpow.pop %v908
  %v910 = vadd.f32 %v909, 1.0
  %v911 = vrcp.pop %v910
  %v912 = vmul.f32 %v910, %v911
  %v913 = vsub.f32 1.0, %v912
  %v914 = vmul.f32 %v911, %v913
  %v915 = vadd.f32 %v911, %v914
  %vm916 = vweird.f32 %v910
  %vm917 = vweird.f32 %v911
  %vm918 = vmor %vm916, %vm917
  %v919 = vsel %vm918, %v911, %v915
  %v920 = vand.u32 2147483647, %v910
  %vm921 = vcmp.eq.f32.partialorder %v920, 8.507059e+37
  %v922 = vand.u32 %v910, 2147483648
  %v923 = vor.u32 1.1754944e-38, %v922
  %v924 = vsel %vm921, %v923, %v919
  %v925 = vmul.f32 1.0, %v924
  %v926 = vmul.f32 %v905, %v758
  %v927 = vmul.f32 %v886, %v906
  %v928 = vadd.f32 %v926, %v927
  %v929 = vtanh.pop %v928
  %v930 = vmul.f32 %v925, %v929
  %s931 = scalar_lea.vmem %s0, 12
  %v932 = vld [vmem:[%s931] sm:$0xf]
  %v933 = vpack.c.bf16 %v930, %v930
  %934 = vmatpush.bf16.msra.mxu0 %v324
  %935 = vmatpush.bf16.msra.mxu0 %v320
  %936 = vmatpush.bf16.msra.mxu0 %v316
  %937 = vmatpush.bf16.msra.mxu0 %v312
  %938 = vmatpush.bf16.msra.mxu0 %v308
  %939 = vmatpush.bf16.msra.mxu0 %v304
  %940 = vmatpush.bf16.msra.mxu0 %v300
  %941 = vmatpush.bf16.msra.mxu0 %v296
  %942 = vmatmul.bf16.gmra.mxu0 %v932
  %v943 = vpop.f32.mrf.mxu0
  %v944 = vadd.f32 %v28, %v943
  %v945 = vpop.f32.mrf.mxu0
  %946 = vdwg.mxu0
  %947 = vmatpush.bf16.msra.mxu0 %v356
  %948 = vmatpush.bf16.msra.mxu0 %v352
  %949 = vmatpush.bf16.msra.mxu0 %v348
  %950 = vmatpush.bf16.msra.mxu0 %v344
  %951 = vmatpush.bf16.msra.mxu0 %v340
  %952 = vmatpush.bf16.msra.mxu0 %v336
  %953 = vmatpush.bf16.msra.mxu0 %v332
  %954 = vmatpush.bf16.msra.mxu0 %v328
  %955 = vmatmul.bf16.gmra.mxu0 %v933
  %v956 = vpop.f32.mrf.mxu0
  %v957 = vadd.f32 %v944, %v956
  %v958 = vpop.f32.mrf.mxu0
  %959 = vdwg.mxu0
  %960 = vmatpush.bf16.msra.mxu0 %v325
  %961 = vmatpush.bf16.msra.mxu0 %v321
  %962 = vmatpush.bf16.msra.mxu0 %v317
  %963 = vmatpush.bf16.msra.mxu0 %v313
  %964 = vmatpush.bf16.msra.mxu0 %v309
  %965 = vmatpush.bf16.msra.mxu0 %v305
  %966 = vmatpush.bf16.msra.mxu0 %v301
  %967 = vmatpush.bf16.msra.mxu0 %v297
  %968 = vmatmul.bf16.gmra.mxu0 %v932
  %v969 = vpop.f32.mrf.mxu0
  %v970 = vadd.f32 %v29, %v969
  %v971 = vpop.f32.mrf.mxu0
  %972 = vdwg.mxu0
  %973 = vmatpush.bf16.msra.mxu0 %v357
  %974 = vmatpush.bf16.msra.mxu0 %v353
  %975 = vmatpush.bf16.msra.mxu0 %v349
  %976 = vmatpush.bf16.msra.mxu0 %v345
  %977 = vmatpush.bf16.msra.mxu0 %v341
  %978 = vmatpush.bf16.msra.mxu0 %v337
  %979 = vmatpush.bf16.msra.mxu0 %v333
  %980 = vmatpush.bf16.msra.mxu0 %v329
  %981 = vmatmul.bf16.gmra.mxu0 %v933
  %v982 = vpop.f32.mrf.mxu0
  %v983 = vadd.f32 %v970, %v982
  %v984 = vpop.f32.mrf.mxu0
  %985 = vdwg.mxu0
  %986 = vmatpush.bf16.msra.mxu0 %v326
  %987 = vmatpush.bf16.msra.mxu0 %v322
  %988 = vmatpush.bf16.msra.mxu0 %v318
  %989 = vmatpush.bf16.msra.mxu0 %v314
  %990 = vmatpush.bf16.msra.mxu0 %v310
  %991 = vmatpush.bf16.msra.mxu0 %v306
  %992 = vmatpush.bf16.msra.mxu0 %v302
  %993 = vmatpush.bf16.msra.mxu0 %v298
  %994 = vmatmul.bf16.gmra.mxu0 %v932
  %v995 = vpop.f32.mrf.mxu0
  %v996 = vadd.f32 %v30, %v995
  %v997 = vpop.f32.mrf.mxu0
  %998 = vdwg.mxu0
  %999 = vmatpush.bf16.msra.mxu0 %v358
  %1000 = vmatpush.bf16.msra.mxu0 %v354
  %1001 = vmatpush.bf16.msra.mxu0 %v350
  %1002 = vmatpush.bf16.msra.mxu0 %v346
  %1003 = vmatpush.bf16.msra.mxu0 %v342
  %1004 = vmatpush.bf16.msra.mxu0 %v338
  %1005 = vmatpush.bf16.msra.mxu0 %v334
  %1006 = vmatpush.bf16.msra.mxu0 %v330
  %1007 = vmatmul.bf16.gmra.mxu0 %v933
  %v1008 = vpop.f32.mrf.mxu0
  %v1009 = vadd.f32 %v996, %v1008
  %v1010 = vpop.f32.mrf.mxu0
  %1011 = vdwg.mxu0
  %1012 = vmatpush.bf16.msra.mxu0 %v327
  %1013 = vmatpush.bf16.msra.mxu0 %v323
  %1014 = vmatpush.bf16.msra.mxu0 %v319
  %1015 = vmatpush.bf16.msra.mxu0 %v315
  %1016 = vmatpush.bf16.msra.mxu0 %v311
  %1017 = vmatpush.bf16.msra.mxu0 %v307
  %1018 = vmatpush.bf16.msra.mxu0 %v303
  %1019 = vmatpush.bf16.msra.mxu0 %v299
  %1020 = vmatmul.bf16.gmra.mxu0 %v932
  %v1021 = vpop.f32.mrf.mxu0
  %v1022 = vadd.f32 %v31, %v1021
  %v1023 = vpop.f32.mrf.mxu0
  %1024 = vdwg.mxu0
  %1025 = vmatpush.bf16.msra.mxu0 %v359
  %1026 = vmatpush.bf16.msra.mxu0 %v355
  %1027 = vmatpush.bf16.msra.mxu0 %v351
  %1028 = vmatpush.bf16.msra.mxu0 %v347
  %1029 = vmatpush.bf16.msra.mxu0 %v343
  %1030 = vmatpush.bf16.msra.mxu0 %v339
  %1031 = vmatpush.bf16.msra.mxu0 %v335
  %1032 = vmatpush.bf16.msra.mxu0 %v331
  %1033 = vmatmul.bf16.gmra.mxu0 %v933
  %v1034 = vpop.f32.mrf.mxu0
  %v1035 = vadd.f32 %v1022, %v1034
  %v1036 = vpop.f32.mrf.mxu0
  %1037 = vdwg.mxu0
  %v1038 = vxor.u32 %v957, 2147483648
  %v1039 = vmul.f32 %v1038, 1.442695
  %v1040 = vpow.pop %v1039
  %v1041 = vadd.f32 %v1040, 1.0
  %v1042 = vrcp.pop %v1041
  %v1043 = vmul.f32 %v1041, %v1042
  %v1044 = vsub.f32 1.0, %v1043
  %v1045 = vmul.f32 %v1042, %v1044
  %v1046 = vadd.f32 %v1042, %v1045
  %vm1047 = vweird.f32 %v1041
  %vm1048 = vweird.f32 %v1042
  %vm1049 = vmor %vm1047, %vm1048
  %v1050 = vsel %vm1049, %v1042, %v1046
  %v1051 = vand.u32 2147483647, %v1041
  %vm1052 = vcmp.eq.f32.partialorder %v1051, 8.507059e+37
  %v1053 = vand.u32 %v1041, 2147483648
  %v1054 = vor.u32 1.1754944e-38, %v1053
  %v1055 = vsel %vm1052, %v1054, %v1050
  %v1056 = vmul.f32 1.0, %v1055
  %v1057 = vxor.u32 %v983, 2147483648
  %v1058 = vmul.f32 %v1057, 1.442695
  %v1059 = vpow.pop %v1058
  %v1060 = vadd.f32 %v1059, 1.0
  %v1061 = vrcp.pop %v1060
  %v1062 = vmul.f32 %v1060, %v1061
  %v1063 = vsub.f32 1.0, %v1062
  %v1064 = vmul.f32 %v1061, %v1063
  %v1065 = vadd.f32 %v1061, %v1064
  %vm1066 = vweird.f32 %v1060
  %vm1067 = vweird.f32 %v1061
  %vm1068 = vmor %vm1066, %vm1067
  %v1069 = vsel %vm1068, %v1061, %v1065
  %v1070 = vand.u32 2147483647, %v1060
  %vm1071 = vcmp.eq.f32.partialorder %v1070, 8.507059e+37
  %v1072 = vand.u32 %v1060, 2147483648
  %v1073 = vor.u32 1.1754944e-38, %v1072
  %v1074 = vsel %vm1071, %v1073, %v1069
  %v1075 = vmul.f32 1.0, %v1074
  %v1076 = vtanh.pop %v1009
  %v1077 = vxor.u32 %v1035, 2147483648
  %v1078 = vmul.f32 %v1077, 1.442695
  %v1079 = vpow.pop %v1078
  %v1080 = vadd.f32 %v1079, 1.0
  %v1081 = vrcp.pop %v1080
  %v1082 = vmul.f32 %v1080, %v1081
  %v1083 = vsub.f32 1.0, %v1082
  %v1084 = vmul.f32 %v1081, %v1083
  %v1085 = vadd.f32 %v1081, %v1084
  %vm1086 = vweird.f32 %v1080
  %vm1087 = vweird.f32 %v1081
  %vm1088 = vmor %vm1086, %vm1087
  %v1089 = vsel %vm1088, %v1081, %v1085
  %v1090 = vand.u32 2147483647, %v1080
  %vm1091 = vcmp.eq.f32.partialorder %v1090, 8.507059e+37
  %v1092 = vand.u32 %v1080, 2147483648
  %v1093 = vor.u32 1.1754944e-38, %v1092
  %v1094 = vsel %vm1091, %v1093, %v1089
  %v1095 = vmul.f32 1.0, %v1094
  %v1096 = vmul.f32 %v1075, %v928
  %v1097 = vmul.f32 %v1056, %v1076
  %v1098 = vadd.f32 %v1096, %v1097
  %v1099 = vtanh.pop %v1098
  %v1100 = vmul.f32 %v1095, %v1099
  %s1101 = scalar_lea.vmem %s0, 16
  %v1102 = vld [vmem:[%s1101] sm:$0xf]
  %v1103 = vpack.c.bf16 %v1100, %v1100
  %1104 = vmatpush.bf16.msra.mxu0 %v324
  %1105 = vmatpush.bf16.msra.mxu0 %v320
  %1106 = vmatpush.bf16.msra.mxu0 %v316
  %1107 = vmatpush.bf16.msra.mxu0 %v312
  %1108 = vmatpush.bf16.msra.mxu0 %v308
  %1109 = vmatpush.bf16.msra.mxu0 %v304
  %1110 = vmatpush.bf16.msra.mxu0 %v300
  %1111 = vmatpush.bf16.msra.mxu0 %v296
  %1112 = vmatmul.bf16.gmra.mxu0 %v1102
  %v1113 = vpop.f32.mrf.mxu0
  %v1114 = vadd.f32 %v28, %v1113
  %v1115 = vpop.f32.mrf.mxu0
  %1116 = vdwg.mxu0
  %1117 = vmatpush.bf16.msra.mxu0 %v356
  %1118 = vmatpush.bf16.msra.mxu0 %v352
  %1119 = vmatpush.bf16.msra.mxu0 %v348
  %1120 = vmatpush.bf16.msra.mxu0 %v344
  %1121 = vmatpush.bf16.msra.mxu0 %v340
  %1122 = vmatpush.bf16.msra.mxu0 %v336
  %1123 = vmatpush.bf16.msra.mxu0 %v332
  %1124 = vmatpush.bf16.msra.mxu0 %v328
  %1125 = vmatmul.bf16.gmra.mxu0 %v1103
  %v1126 = vpop.f32.mrf.mxu0
  %v1127 = vadd.f32 %v1114, %v1126
  %v1128 = vpop.f32.mrf.mxu0
  %1129 = vdwg.mxu0
  %1130 = vmatpush.bf16.msra.mxu0 %v325
  %1131 = vmatpush.bf16.msra.mxu0 %v321
  %1132 = vmatpush.bf16.msra.mxu0 %v317
  %1133 = vmatpush.bf16.msra.mxu0 %v313
  %1134 = vmatpush.bf16.msra.mxu0 %v309
  %1135 = vmatpush.bf16.msra.mxu0 %v305
  %1136 = vmatpush.bf16.msra.mxu0 %v301
  %1137 = vmatpush.bf16.msra.mxu0 %v297
  %1138 = vmatmul.bf16.gmra.mxu0 %v1102
  %v1139 = vpop.f32.mrf.mxu0
  %v1140 = vadd.f32 %v29, %v1139
  %v1141 = vpop.f32.mrf.mxu0
  %1142 = vdwg.mxu0
  %1143 = vmatpush.bf16.msra.mxu0 %v357
  %1144 = vmatpush.bf16.msra.mxu0 %v353
  %1145 = vmatpush.bf16.msra.mxu0 %v349
  %1146 = vmatpush.bf16.msra.mxu0 %v345
  %1147 = vmatpush.bf16.msra.mxu0 %v341
  %1148 = vmatpush.bf16.msra.mxu0 %v337
  %1149 = vmatpush.bf16.msra.mxu0 %v333
  %1150 = vmatpush.bf16.msra.mxu0 %v329
  %1151 = vmatmul.bf16.gmra.mxu0 %v1103
  %v1152 = vpop.f32.mrf.mxu0
  %v1153 = vadd.f32 %v1140, %v1152
  %v1154 = vpop.f32.mrf.mxu0
  %1155 = vdwg.mxu0
  %1156 = vmatpush.bf16.msra.mxu0 %v326
  %1157 = vmatpush.bf16.msra.mxu0 %v322
  %1158 = vmatpush.bf16.msra.mxu0 %v318
  %1159 = vmatpush.bf16.msra.mxu0 %v314
  %1160 = vmatpush.bf16.msra.mxu0 %v310
  %1161 = vmatpush.bf16.msra.mxu0 %v306
  %1162 = vmatpush.bf16.msra.mxu0 %v302
  %1163 = vmatpush.bf16.msra.mxu0 %v298
  %1164 = vmatmul.bf16.gmra.mxu0 %v1102
  %v1165 = vpop.f32.mrf.mxu0
  %v1166 = vadd.f32 %v30, %v1165
  %v1167 = vpop.f32.mrf.mxu0
  %1168 = vdwg.mxu0
  %1169 = vmatpush.bf16.msra.mxu0 %v358
  %1170 = vmatpush.bf16.msra.mxu0 %v354
  %1171 = vmatpush.bf16.msra.mxu0 %v350
  %1172 = vmatpush.bf16.msra.mxu0 %v346
  %1173 = vmatpush.bf16.msra.mxu0 %v342
  %1174 = vmatpush.bf16.msra.mxu0 %v338
  %1175 = vmatpush.bf16.msra.mxu0 %v334
  %1176 = vmatpush.bf16.msra.mxu0 %v330
  %1177 = vmatmul.bf16.gmra.mxu0 %v1103
  %v1178 = vpop.f32.mrf.mxu0
  %v1179 = vadd.f32 %v1166, %v1178
  %v1180 = vpop.f32.mrf.mxu0
  %1181 = vdwg.mxu0
  %1182 = vmatpush.bf16.msra.mxu0 %v327
  %1183 = vmatpush.bf16.msra.mxu0 %v323
  %1184 = vmatpush.bf16.msra.mxu0 %v319
  %1185 = vmatpush.bf16.msra.mxu0 %v315
  %1186 = vmatpush.bf16.msra.mxu0 %v311
  %1187 = vmatpush.bf16.msra.mxu0 %v307
  %1188 = vmatpush.bf16.msra.mxu0 %v303
  %1189 = vmatpush.bf16.msra.mxu0 %v299
  %1190 = vmatmul.bf16.gmra.mxu0 %v1102
  %v1191 = vpop.f32.mrf.mxu0
  %v1192 = vadd.f32 %v31, %v1191
  %v1193 = vpop.f32.mrf.mxu0
  %1194 = vdwg.mxu0
  %1195 = vmatpush.bf16.msra.mxu0 %v359
  %1196 = vmatpush.bf16.msra.mxu0 %v355
  %1197 = vmatpush.bf16.msra.mxu0 %v351
  %1198 = vmatpush.bf16.msra.mxu0 %v347
  %1199 = vmatpush.bf16.msra.mxu0 %v343
  %1200 = vmatpush.bf16.msra.mxu0 %v339
  %1201 = vmatpush.bf16.msra.mxu0 %v335
  %1202 = vmatpush.bf16.msra.mxu0 %v331
  %1203 = vmatmul.bf16.gmra.mxu0 %v1103
  %v1204 = vpop.f32.mrf.mxu0
  %v1205 = vadd.f32 %v1192, %v1204
  %v1206 = vpop.f32.mrf.mxu0
  %1207 = vdwg.mxu0
  %v1208 = vxor.u32 %v1127, 2147483648
  %v1209 = vmul.f32 %v1208, 1.442695
  %v1210 = vpow.pop %v1209
  %v1211 = vadd.f32 %v1210, 1.0
  %v1212 = vrcp.pop %v1211
  %v1213 = vmul.f32 %v1211, %v1212
  %v1214 = vsub.f32 1.0, %v1213
  %v1215 = vmul.f32 %v1212, %v1214
  %v1216 = vadd.f32 %v1212, %v1215
  %vm1217 = vweird.f32 %v1211
  %vm1218 = vweird.f32 %v1212
  %vm1219 = vmor %vm1217, %vm1218
  %v1220 = vsel %vm1219, %v1212, %v1216
  %v1221 = vand.u32 2147483647, %v1211
  %vm1222 = vcmp.eq.f32.partialorder %v1221, 8.507059e+37
  %v1223 = vand.u32 %v1211, 2147483648
  %v1224 = vor.u32 1.1754944e-38, %v1223
  %v1225 = vsel %vm1222, %v1224, %v1220
  %v1226 = vmul.f32 1.0, %v1225
  %v1227 = vxor.u32 %v1153, 2147483648
  %v1228 = vmul.f32 %v1227, 1.442695
  %v1229 = vpow.pop %v1228
  %v1230 = vadd.f32 %v1229, 1.0
  %v1231 = vrcp.pop %v1230
  %v1232 = vmul.f32 %v1230, %v1231
  %v1233 = vsub.f32 1.0, %v1232
  %v1234 = vmul.f32 %v1231, %v1233
  %v1235 = vadd.f32 %v1231, %v1234
  %vm1236 = vweird.f32 %v1230
  %vm1237 = vweird.f32 %v1231
  %vm1238 = vmor %vm1236, %vm1237
  %v1239 = vsel %vm1238, %v1231, %v1235
  %v1240 = vand.u32 2147483647, %v1230
  %vm1241 = vcmp.eq.f32.partialorder %v1240, 8.507059e+37
  %v1242 = vand.u32 %v1230, 2147483648
  %v1243 = vor.u32 1.1754944e-38, %v1242
  %v1244 = vsel %vm1241, %v1243, %v1239
  %v1245 = vmul.f32 1.0, %v1244
  %v1246 = vtanh.pop %v1179
  %v1247 = vxor.u32 %v1205, 2147483648
  %v1248 = vmul.f32 %v1247, 1.442695
  %v1249 = vpow.pop %v1248
  %v1250 = vadd.f32 %v1249, 1.0
  %v1251 = vrcp.pop %v1250
  %v1252 = vmul.f32 %v1250, %v1251
  %v1253 = vsub.f32 1.0, %v1252
  %v1254 = vmul.f32 %v1251, %v1253
  %v1255 = vadd.f32 %v1251, %v1254
  %vm1256 = vweird.f32 %v1250
  %vm1257 = vweird.f32 %v1251
  %vm1258 = vmor %vm1256, %vm1257
  %v1259 = vsel %vm1258, %v1251, %v1255
  %v1260 = vand.u32 2147483647, %v1250
  %vm1261 = vcmp.eq.f32.partialorder %v1260, 8.507059e+37
  %v1262 = vand.u32 %v1250, 2147483648
  %v1263 = vor.u32 1.1754944e-38, %v1262
  %v1264 = vsel %vm1261, %v1263, %v1259
  %v1265 = vmul.f32 1.0, %v1264
  %v1266 = vmul.f32 %v1245, %v1098
  %v1267 = vmul.f32 %v1226, %v1246
  %v1268 = vadd.f32 %v1266, %v1267
  %v1269 = vtanh.pop %v1268
  %v1270 = vmul.f32 %v1265, %v1269
  %s1271 = scalar_lea.vmem %s0, 20
  %v1272 = vld [vmem:[%s1271] sm:$0xf]
  %v1273 = vpack.c.bf16 %v1270, %v1270
  %1274 = vmatpush.bf16.msra.mxu0 %v324
  %1275 = vmatpush.bf16.msra.mxu0 %v320
  %1276 = vmatpush.bf16.msra.mxu0 %v316
  %1277 = vmatpush.bf16.msra.mxu0 %v312
  %1278 = vmatpush.bf16.msra.mxu0 %v308
  %1279 = vmatpush.bf16.msra.mxu0 %v304
  %1280 = vmatpush.bf16.msra.mxu0 %v300
  %1281 = vmatpush.bf16.msra.mxu0 %v296
  %1282 = vmatmul.bf16.gmra.mxu0 %v1272
  %v1283 = vpop.f32.mrf.mxu0
  %v1284 = vadd.f32 %v28, %v1283
  %v1285 = vpop.f32.mrf.mxu0
  %1286 = vdwg.mxu0
  %1287 = vmatpush.bf16.msra.mxu0 %v356
  %1288 = vmatpush.bf16.msra.mxu0 %v352
  %1289 = vmatpush.bf16.msra.mxu0 %v348
  %1290 = vmatpush.bf16.msra.mxu0 %v344
  %1291 = vmatpush.bf16.msra.mxu0 %v340
  %1292 = vmatpush.bf16.msra.mxu0 %v336
  %1293 = vmatpush.bf16.msra.mxu0 %v332
  %1294 = vmatpush.bf16.msra.mxu0 %v328
  %1295 = vmatmul.bf16.gmra.mxu0 %v1273
  %v1296 = vpop.f32.mrf.mxu0
  %v1297 = vadd.f32 %v1284, %v1296
  %v1298 = vpop.f32.mrf.mxu0
  %1299 = vdwg.mxu0
  %1300 = vmatpush.bf16.msra.mxu0 %v325
  %1301 = vmatpush.bf16.msra.mxu0 %v321
  %1302 = vmatpush.bf16.msra.mxu0 %v317
  %1303 = vmatpush.bf16.msra.mxu0 %v313
  %1304 = vmatpush.bf16.msra.mxu0 %v309
  %1305 = vmatpush.bf16.msra.mxu0 %v305
  %1306 = vmatpush.bf16.msra.mxu0 %v301
  %1307 = vmatpush.bf16.msra.mxu0 %v297
  %1308 = vmatmul.bf16.gmra.mxu0 %v1272
  %v1309 = vpop.f32.mrf.mxu0
  %v1310 = vadd.f32 %v29, %v1309
  %v1311 = vpop.f32.mrf.mxu0
  %1312 = vdwg.mxu0
  %1313 = vmatpush.bf16.msra.mxu0 %v357
  %1314 = vmatpush.bf16.msra.mxu0 %v353
  %1315 = vmatpush.bf16.msra.mxu0 %v349
  %1316 = vmatpush.bf16.msra.mxu0 %v345
  %1317 = vmatpush.bf16.msra.mxu0 %v341
  %1318 = vmatpush.bf16.msra.mxu0 %v337
  %1319 = vmatpush.bf16.msra.mxu0 %v333
  %1320 = vmatpush.bf16.msra.mxu0 %v329
  %1321 = vmatmul.bf16.gmra.mxu0 %v1273
  %v1322 = vpop.f32.mrf.mxu0
  %v1323 = vadd.f32 %v1310, %v1322
  %v1324 = vpop.f32.mrf.mxu0
  %1325 = vdwg.mxu0
  %1326 = vmatpush.bf16.msra.mxu0 %v326
  %1327 = vmatpush.bf16.msra.mxu0 %v322
  %1328 = vmatpush.bf16.msra.mxu0 %v318
  %1329 = vmatpush.bf16.msra.mxu0 %v314
  %1330 = vmatpush.bf16.msra.mxu0 %v310
  %1331 = vmatpush.bf16.msra.mxu0 %v306
  %1332 = vmatpush.bf16.msra.mxu0 %v302
  %1333 = vmatpush.bf16.msra.mxu0 %v298
  %1334 = vmatmul.bf16.gmra.mxu0 %v1272
  %v1335 = vpop.f32.mrf.mxu0
  %v1336 = vadd.f32 %v30, %v1335
  %v1337 = vpop.f32.mrf.mxu0
  %1338 = vdwg.mxu0
  %1339 = vmatpush.bf16.msra.mxu0 %v358
  %1340 = vmatpush.bf16.msra.mxu0 %v354
  %1341 = vmatpush.bf16.msra.mxu0 %v350
  %1342 = vmatpush.bf16.msra.mxu0 %v346
  %1343 = vmatpush.bf16.msra.mxu0 %v342
  %1344 = vmatpush.bf16.msra.mxu0 %v338
  %1345 = vmatpush.bf16.msra.mxu0 %v334
  %1346 = vmatpush.bf16.msra.mxu0 %v330
  %1347 = vmatmul.bf16.gmra.mxu0 %v1273
  %v1348 = vpop.f32.mrf.mxu0
  %v1349 = vadd.f32 %v1336, %v1348
  %v1350 = vpop.f32.mrf.mxu0
  %1351 = vdwg.mxu0
  %1352 = vmatpush.bf16.msra.mxu0 %v327
  %1353 = vmatpush.bf16.msra.mxu0 %v323
  %1354 = vmatpush.bf16.msra.mxu0 %v319
  %1355 = vmatpush.bf16.msra.mxu0 %v315
  %1356 = vmatpush.bf16.msra.mxu0 %v311
  %1357 = vmatpush.bf16.msra.mxu0 %v307
  %1358 = vmatpush.bf16.msra.mxu0 %v303
  %1359 = vmatpush.bf16.msra.mxu0 %v299
  %1360 = vmatmul.bf16.gmra.mxu0 %v1272
  %v1361 = vpop.f32.mrf.mxu0
  %v1362 = vadd.f32 %v31, %v1361
  %v1363 = vpop.f32.mrf.mxu0
  %1364 = vdwg.mxu0
  %1365 = vmatpush.bf16.msra.mxu0 %v359
  %1366 = vmatpush.bf16.msra.mxu0 %v355
  %1367 = vmatpush.bf16.msra.mxu0 %v351
  %1368 = vmatpush.bf16.msra.mxu0 %v347
  %1369 = vmatpush.bf16.msra.mxu0 %v343
  %1370 = vmatpush.bf16.msra.mxu0 %v339
  %1371 = vmatpush.bf16.msra.mxu0 %v335
  %1372 = vmatpush.bf16.msra.mxu0 %v331
  %1373 = vmatmul.bf16.gmra.mxu0 %v1273
  %v1374 = vpop.f32.mrf.mxu0
  %v1375 = vadd.f32 %v1362, %v1374
  %v1376 = vpop.f32.mrf.mxu0
  %1377 = vdwg.mxu0
  %v1378 = vxor.u32 %v1297, 2147483648
  %v1379 = vmul.f32 %v1378, 1.442695
  %v1380 = vpow.pop %v1379
  %v1381 = vadd.f32 %v1380, 1.0
  %v1382 = vrcp.pop %v1381
  %v1383 = vmul.f32 %v1381, %v1382
  %v1384 = vsub.f32 1.0, %v1383
  %v1385 = vmul.f32 %v1382, %v1384
  %v1386 = vadd.f32 %v1382, %v1385
  %vm1387 = vweird.f32 %v1381
  %vm1388 = vweird.f32 %v1382
  %vm1389 = vmor %vm1387, %vm1388
  %v1390 = vsel %vm1389, %v1382, %v1386
  %v1391 = vand.u32 2147483647, %v1381
  %vm1392 = vcmp.eq.f32.partialorder %v1391, 8.507059e+37
  %v1393 = vand.u32 %v1381, 2147483648
  %v1394 = vor.u32 1.1754944e-38, %v1393
  %v1395 = vsel %vm1392, %v1394, %v1390
  %v1396 = vmul.f32 1.0, %v1395
  %v1397 = vxor.u32 %v1323, 2147483648
  %v1398 = vmul.f32 %v1397, 1.442695
  %v1399 = vpow.pop %v1398
  %v1400 = vadd.f32 %v1399, 1.0
  %v1401 = vrcp.pop %v1400
  %v1402 = vmul.f32 %v1400, %v1401
  %v1403 = vsub.f32 1.0, %v1402
  %v1404 = vmul.f32 %v1401, %v1403
  %v1405 = vadd.f32 %v1401, %v1404
  %vm1406 = vweird.f32 %v1400
  %vm1407 = vweird.f32 %v1401
  %vm1408 = vmor %vm1406, %vm1407
  %v1409 = vsel %vm1408, %v1401, %v1405
  %v1410 = vand.u32 2147483647, %v1400
  %vm1411 = vcmp.eq.f32.partialorder %v1410, 8.507059e+37
  %v1412 = vand.u32 %v1400, 2147483648
  %v1413 = vor.u32 1.1754944e-38, %v1412
  %v1414 = vsel %vm1411, %v1413, %v1409
  %v1415 = vmul.f32 1.0, %v1414
  %v1416 = vtanh.pop %v1349
  %v1417 = vxor.u32 %v1375, 2147483648
  %v1418 = vmul.f32 %v1417, 1.442695
  %v1419 = vpow.pop %v1418
  %v1420 = vadd.f32 %v1419, 1.0
  %v1421 = vrcp.pop %v1420
  %v1422 = vmul.f32 %v1420, %v1421
  %v1423 = vsub.f32 1.0, %v1422
  %v1424 = vmul.f32 %v1421, %v1423
  %v1425 = vadd.f32 %v1421, %v1424
  %vm1426 = vweird.f32 %v1420
  %vm1427 = vweird.f32 %v1421
  %vm1428 = vmor %vm1426, %vm1427
  %v1429 = vsel %vm1428, %v1421, %v1425
  %v1430 = vand.u32 2147483647, %v1420
  %vm1431 = vcmp.eq.f32.partialorder %v1430, 8.507059e+37
  %v1432 = vand.u32 %v1420, 2147483648
  %v1433 = vor.u32 1.1754944e-38, %v1432
  %v1434 = vsel %vm1431, %v1433, %v1429
  %v1435 = vmul.f32 1.0, %v1434
  %v1436 = vmul.f32 %v1415, %v1268
  %v1437 = vmul.f32 %v1396, %v1416
  %v1438 = vadd.f32 %v1436, %v1437
  %v1439 = vtanh.pop %v1438
  %v1440 = vmul.f32 %v1435, %v1439
  %s1441 = scalar_lea.vmem %s0, 24
  %v1442 = vld [vmem:[%s1441] sm:$0xf]
  %v1443 = vpack.c.bf16 %v1440, %v1440
  %1444 = vmatpush.bf16.msra.mxu0 %v324
  %1445 = vmatpush.bf16.msra.mxu0 %v320
  %1446 = vmatpush.bf16.msra.mxu0 %v316
  %1447 = vmatpush.bf16.msra.mxu0 %v312
  %1448 = vmatpush.bf16.msra.mxu0 %v308
  %1449 = vmatpush.bf16.msra.mxu0 %v304
  %1450 = vmatpush.bf16.msra.mxu0 %v300
  %1451 = vmatpush.bf16.msra.mxu0 %v296
  %1452 = vmatmul.bf16.gmra.mxu0 %v1442
  %v1453 = vpop.f32.mrf.mxu0
  %v1454 = vadd.f32 %v28, %v1453
  %v1455 = vpop.f32.mrf.mxu0
  %1456 = vdwg.mxu0
  %1457 = vmatpush.bf16.msra.mxu0 %v356
  %1458 = vmatpush.bf16.msra.mxu0 %v352
  %1459 = vmatpush.bf16.msra.mxu0 %v348
  %1460 = vmatpush.bf16.msra.mxu0 %v344
  %1461 = vmatpush.bf16.msra.mxu0 %v340
  %1462 = vmatpush.bf16.msra.mxu0 %v336
  %1463 = vmatpush.bf16.msra.mxu0 %v332
  %1464 = vmatpush.bf16.msra.mxu0 %v328
  %1465 = vmatmul.bf16.gmra.mxu0 %v1443
  %v1466 = vpop.f32.mrf.mxu0
  %v1467 = vadd.f32 %v1454, %v1466
  %v1468 = vpop.f32.mrf.mxu0
  %1469 = vdwg.mxu0
  %1470 = vmatpush.bf16.msra.mxu0 %v325
  %1471 = vmatpush.bf16.msra.mxu0 %v321
  %1472 = vmatpush.bf16.msra.mxu0 %v317
  %1473 = vmatpush.bf16.msra.mxu0 %v313
  %1474 = vmatpush.bf16.msra.mxu0 %v309
  %1475 = vmatpush.bf16.msra.mxu0 %v305
  %1476 = vmatpush.bf16.msra.mxu0 %v301
  %1477 = vmatpush.bf16.msra.mxu0 %v297
  %1478 = vmatmul.bf16.gmra.mxu0 %v1442
  %v1479 = vpop.f32.mrf.mxu0
  %v1480 = vadd.f32 %v29, %v1479
  %v1481 = vpop.f32.mrf.mxu0
  %1482 = vdwg.mxu0
  %1483 = vmatpush.bf16.msra.mxu0 %v357
  %1484 = vmatpush.bf16.msra.mxu0 %v353
  %1485 = vmatpush.bf16.msra.mxu0 %v349
  %1486 = vmatpush.bf16.msra.mxu0 %v345
  %1487 = vmatpush.bf16.msra.mxu0 %v341
  %1488 = vmatpush.bf16.msra.mxu0 %v337
  %1489 = vmatpush.bf16.msra.mxu0 %v333
  %1490 = vmatpush.bf16.msra.mxu0 %v329
  %1491 = vmatmul.bf16.gmra.mxu0 %v1443
  %v1492 = vpop.f32.mrf.mxu0
  %v1493 = vadd.f32 %v1480, %v1492
  %v1494 = vpop.f32.mrf.mxu0
  %1495 = vdwg.mxu0
  %1496 = vmatpush.bf16.msra.mxu0 %v326
  %1497 = vmatpush.bf16.msra.mxu0 %v322
  %1498 = vmatpush.bf16.msra.mxu0 %v318
  %1499 = vmatpush.bf16.msra.mxu0 %v314
  %1500 = vmatpush.bf16.msra.mxu0 %v310
  %1501 = vmatpush.bf16.msra.mxu0 %v306
  %1502 = vmatpush.bf16.msra.mxu0 %v302
  %1503 = vmatpush.bf16.msra.mxu0 %v298
  %1504 = vmatmul.bf16.gmra.mxu0 %v1442
  %v1505 = vpop.f32.mrf.mxu0
  %v1506 = vadd.f32 %v30, %v1505
  %v1507 = vpop.f32.mrf.mxu0
  %1508 = vdwg.mxu0
  %1509 = vmatpush.bf16.msra.mxu0 %v358
  %1510 = vmatpush.bf16.msra.mxu0 %v354
  %1511 = vmatpush.bf16.msra.mxu0 %v350
  %1512 = vmatpush.bf16.msra.mxu0 %v346
  %1513 = vmatpush.bf16.msra.mxu0 %v342
  %1514 = vmatpush.bf16.msra.mxu0 %v338
  %1515 = vmatpush.bf16.msra.mxu0 %v334
  %1516 = vmatpush.bf16.msra.mxu0 %v330
  %1517 = vmatmul.bf16.gmra.mxu0 %v1443
  %v1518 = vpop.f32.mrf.mxu0
  %v1519 = vadd.f32 %v1506, %v1518
  %v1520 = vpop.f32.mrf.mxu0
  %1521 = vdwg.mxu0
  %1522 = vmatpush.bf16.msra.mxu0 %v327
  %1523 = vmatpush.bf16.msra.mxu0 %v323
  %1524 = vmatpush.bf16.msra.mxu0 %v319
  %1525 = vmatpush.bf16.msra.mxu0 %v315
  %1526 = vmatpush.bf16.msra.mxu0 %v311
  %1527 = vmatpush.bf16.msra.mxu0 %v307
  %1528 = vmatpush.bf16.msra.mxu0 %v303
  %1529 = vmatpush.bf16.msra.mxu0 %v299
  %1530 = vmatmul.bf16.gmra.mxu0 %v1442
  %v1531 = vpop.f32.mrf.mxu0
  %v1532 = vadd.f32 %v31, %v1531
  %v1533 = vpop.f32.mrf.mxu0
  %1534 = vdwg.mxu0
  %1535 = vmatpush.bf16.msra.mxu0 %v359
  %1536 = vmatpush.bf16.msra.mxu0 %v355
  %1537 = vmatpush.bf16.msra.mxu0 %v351
  %1538 = vmatpush.bf16.msra.mxu0 %v347
  %1539 = vmatpush.bf16.msra.mxu0 %v343
  %1540 = vmatpush.bf16.msra.mxu0 %v339
  %1541 = vmatpush.bf16.msra.mxu0 %v335
  %1542 = vmatpush.bf16.msra.mxu0 %v331
  %1543 = vmatmul.bf16.gmra.mxu0 %v1443
  %v1544 = vpop.f32.mrf.mxu0
  %v1545 = vadd.f32 %v1532, %v1544
  %v1546 = vpop.f32.mrf.mxu0
  %1547 = vdwg.mxu0
  %v1548 = vxor.u32 %v1467, 2147483648
  %v1549 = vmul.f32 %v1548, 1.442695
  %v1550 = vpow.pop %v1549
  %v1551 = vadd.f32 %v1550, 1.0
  %v1552 = vrcp.pop %v1551
  %v1553 = vmul.f32 %v1551, %v1552
  %v1554 = vsub.f32 1.0, %v1553
  %v1555 = vmul.f32 %v1552, %v1554
  %v1556 = vadd.f32 %v1552, %v1555
  %vm1557 = vweird.f32 %v1551
  %vm1558 = vweird.f32 %v1552
  %vm1559 = vmor %vm1557, %vm1558
  %v1560 = vsel %vm1559, %v1552, %v1556
  %v1561 = vand.u32 2147483647, %v1551
  %vm1562 = vcmp.eq.f32.partialorder %v1561, 8.507059e+37
  %v1563 = vand.u32 %v1551, 2147483648
  %v1564 = vor.u32 1.1754944e-38, %v1563
  %v1565 = vsel %vm1562, %v1564, %v1560
  %v1566 = vmul.f32 1.0, %v1565
  %v1567 = vxor.u32 %v1493, 2147483648
  %v1568 = vmul.f32 %v1567, 1.442695
  %v1569 = vpow.pop %v1568
  %v1570 = vadd.f32 %v1569, 1.0
  %v1571 = vrcp.pop %v1570
  %v1572 = vmul.f32 %v1570, %v1571
  %v1573 = vsub.f32 1.0, %v1572
  %v1574 = vmul.f32 %v1571, %v1573
  %v1575 = vadd.f32 %v1571, %v1574
  %vm1576 = vweird.f32 %v1570
  %vm1577 = vweird.f32 %v1571
  %vm1578 = vmor %vm1576, %vm1577
  %v1579 = vsel %vm1578, %v1571, %v1575
  %v1580 = vand.u32 2147483647, %v1570
  %vm1581 = vcmp.eq.f32.partialorder %v1580, 8.507059e+37
  %v1582 = vand.u32 %v1570, 2147483648
  %v1583 = vor.u32 1.1754944e-38, %v1582
  %v1584 = vsel %vm1581, %v1583, %v1579
  %v1585 = vmul.f32 1.0, %v1584
  %v1586 = vtanh.pop %v1519
  %v1587 = vxor.u32 %v1545, 2147483648
  %v1588 = vmul.f32 %v1587, 1.442695
  %v1589 = vpow.pop %v1588
  %v1590 = vadd.f32 %v1589, 1.0
  %v1591 = vrcp.pop %v1590
  %v1592 = vmul.f32 %v1590, %v1591
  %v1593 = vsub.f32 1.0, %v1592
  %v1594 = vmul.f32 %v1591, %v1593
  %v1595 = vadd.f32 %v1591, %v1594
  %vm1596 = vweird.f32 %v1590
  %vm1597 = vweird.f32 %v1591
  %vm1598 = vmor %vm1596, %vm1597
  %v1599 = vsel %vm1598, %v1591, %v1595
  %v1600 = vand.u32 2147483647, %v1590
  %vm1601 = vcmp.eq.f32.partialorder %v1600, 8.507059e+37
  %v1602 = vand.u32 %v1590, 2147483648
  %v1603 = vor.u32 1.1754944e-38, %v1602
  %v1604 = vsel %vm1601, %v1603, %v1599
  %v1605 = vmul.f32 1.0, %v1604
  %v1606 = vmul.f32 %v1585, %v1438
  %v1607 = vmul.f32 %v1566, %v1586
  %v1608 = vadd.f32 %v1606, %v1607
  %v1609 = vtanh.pop %v1608
  %v1610 = vmul.f32 %v1605, %v1609
  %s1611 = scalar_lea.vmem %s0, 28
  %v1612 = vld [vmem:[%s1611] sm:$0xf]
  %v1613 = vpack.c.bf16 %v1610, %v1610
  %1614 = vmatpush.bf16.msra.mxu0 %v324
  %1615 = vmatpush.bf16.msra.mxu0 %v320
  %1616 = vmatpush.bf16.msra.mxu0 %v316
  %1617 = vmatpush.bf16.msra.mxu0 %v312
  %1618 = vmatpush.bf16.msra.mxu0 %v308
  %1619 = vmatpush.bf16.msra.mxu0 %v304
  %1620 = vmatpush.bf16.msra.mxu0 %v300
  %1621 = vmatpush.bf16.msra.mxu0 %v296
  %1622 = vmatmul.bf16.gmra.mxu0 %v1612
  %v1623 = vpop.f32.mrf.mxu0
  %v1624 = vadd.f32 %v28, %v1623
  %v1625 = vpop.f32.mrf.mxu0
  %1626 = vdwg.mxu0
  %1627 = vmatpush.bf16.msra.mxu0 %v356
  %1628 = vmatpush.bf16.msra.mxu0 %v352
  %1629 = vmatpush.bf16.msra.mxu0 %v348
  %1630 = vmatpush.bf16.msra.mxu0 %v344
  %1631 = vmatpush.bf16.msra.mxu0 %v340
  %1632 = vmatpush.bf16.msra.mxu0 %v336
  %1633 = vmatpush.bf16.msra.mxu0 %v332
  %1634 = vmatpush.bf16.msra.mxu0 %v328
  %1635 = vmatmul.bf16.gmra.mxu0 %v1613
  %v1636 = vpop.f32.mrf.mxu0
  %v1637 = vadd.f32 %v1624, %v1636
  %v1638 = vpop.f32.mrf.mxu0
  %1639 = vdwg.mxu0
  %1640 = vmatpush.bf16.msra.mxu0 %v325
  %1641 = vmatpush.bf16.msra.mxu0 %v321
  %1642 = vmatpush.bf16.msra.mxu0 %v317
  %1643 = vmatpush.bf16.msra.mxu0 %v313
  %1644 = vmatpush.bf16.msra.mxu0 %v309
  %1645 = vmatpush.bf16.msra.mxu0 %v305
  %1646 = vmatpush.bf16.msra.mxu0 %v301
  %1647 = vmatpush.bf16.msra.mxu0 %v297
  %1648 = vmatmul.bf16.gmra.mxu0 %v1612
  %v1649 = vpop.f32.mrf.mxu0
  %v1650 = vadd.f32 %v29, %v1649
  %v1651 = vpop.f32.mrf.mxu0
  %1652 = vdwg.mxu0
  %1653 = vmatpush.bf16.msra.mxu0 %v357
  %1654 = vmatpush.bf16.msra.mxu0 %v353
  %1655 = vmatpush.bf16.msra.mxu0 %v349
  %1656 = vmatpush.bf16.msra.mxu0 %v345
  %1657 = vmatpush.bf16.msra.mxu0 %v341
  %1658 = vmatpush.bf16.msra.mxu0 %v337
  %1659 = vmatpush.bf16.msra.mxu0 %v333
  %1660 = vmatpush.bf16.msra.mxu0 %v329
  %1661 = vmatmul.bf16.gmra.mxu0 %v1613
  %v1662 = vpop.f32.mrf.mxu0
  %v1663 = vadd.f32 %v1650, %v1662
  %v1664 = vpop.f32.mrf.mxu0
  %1665 = vdwg.mxu0
  %1666 = vmatpush.bf16.msra.mxu0 %v326
  %1667 = vmatpush.bf16.msra.mxu0 %v322
  %1668 = vmatpush.bf16.msra.mxu0 %v318
  %1669 = vmatpush.bf16.msra.mxu0 %v314
  %1670 = vmatpush.bf16.msra.mxu0 %v310
  %1671 = vmatpush.bf16.msra.mxu0 %v306
  %1672 = vmatpush.bf16.msra.mxu0 %v302
  %1673 = vmatpush.bf16.msra.mxu0 %v298
  %1674 = vmatmul.bf16.gmra.mxu0 %v1612
  %v1675 = vpop.f32.mrf.mxu0
  %v1676 = vadd.f32 %v30, %v1675
  %v1677 = vpop.f32.mrf.mxu0
  %1678 = vdwg.mxu0
  %1679 = vmatpush.bf16.msra.mxu0 %v358
  %1680 = vmatpush.bf16.msra.mxu0 %v354
  %1681 = vmatpush.bf16.msra.mxu0 %v350
  %1682 = vmatpush.bf16.msra.mxu0 %v346
  %1683 = vmatpush.bf16.msra.mxu0 %v342
  %1684 = vmatpush.bf16.msra.mxu0 %v338
  %1685 = vmatpush.bf16.msra.mxu0 %v334
  %1686 = vmatpush.bf16.msra.mxu0 %v330
  %1687 = vmatmul.bf16.gmra.mxu0 %v1613
  %v1688 = vpop.f32.mrf.mxu0
  %v1689 = vadd.f32 %v1676, %v1688
  %v1690 = vpop.f32.mrf.mxu0
  %1691 = vdwg.mxu0
  %1692 = vmatpush.bf16.msra.mxu0 %v327
  %1693 = vmatpush.bf16.msra.mxu0 %v323
  %1694 = vmatpush.bf16.msra.mxu0 %v319
  %1695 = vmatpush.bf16.msra.mxu0 %v315
  %1696 = vmatpush.bf16.msra.mxu0 %v311
  %1697 = vmatpush.bf16.msra.mxu0 %v307
  %1698 = vmatpush.bf16.msra.mxu0 %v303
  %1699 = vmatpush.bf16.msra.mxu0 %v299
  %1700 = vmatmul.bf16.gmra.mxu0 %v1612
  %v1701 = vpop.f32.mrf.mxu0
  %v1702 = vadd.f32 %v31, %v1701
  %v1703 = vpop.f32.mrf.mxu0
  %1704 = vdwg.mxu0
  %1705 = vmatpush.bf16.msra.mxu0 %v359
  %1706 = vmatpush.bf16.msra.mxu0 %v355
  %1707 = vmatpush.bf16.msra.mxu0 %v351
  %1708 = vmatpush.bf16.msra.mxu0 %v347
  %1709 = vmatpush.bf16.msra.mxu0 %v343
  %1710 = vmatpush.bf16.msra.mxu0 %v339
  %1711 = vmatpush.bf16.msra.mxu0 %v335
  %1712 = vmatpush.bf16.msra.mxu0 %v331
  %1713 = vmatmul.bf16.gmra.mxu0 %v1613
  %v1714 = vpop.f32.mrf.mxu0
  %v1715 = vadd.f32 %v1702, %v1714
  %v1716 = vpop.f32.mrf.mxu0
  %1717 = vdwg.mxu0
  %v1718 = vxor.u32 %v1637, 2147483648
  %v1719 = vmul.f32 %v1718, 1.442695
  %v1720 = vpow.pop %v1719
  %v1721 = vadd.f32 %v1720, 1.0
  %v1722 = vrcp.pop %v1721
  %v1723 = vmul.f32 %v1721, %v1722
  %v1724 = vsub.f32 1.0, %v1723
  %v1725 = vmul.f32 %v1722, %v1724
  %v1726 = vadd.f32 %v1722, %v1725
  %vm1727 = vweird.f32 %v1721
  %vm1728 = vweird.f32 %v1722
  %vm1729 = vmor %vm1727, %vm1728
  %v1730 = vsel %vm1729, %v1722, %v1726
  %v1731 = vand.u32 2147483647, %v1721
  %vm1732 = vcmp.eq.f32.partialorder %v1731, 8.507059e+37
  %v1733 = vand.u32 %v1721, 2147483648
  %v1734 = vor.u32 1.1754944e-38, %v1733
  %v1735 = vsel %vm1732, %v1734, %v1730
  %v1736 = vmul.f32 1.0, %v1735
  %v1737 = vxor.u32 %v1663, 2147483648
  %v1738 = vmul.f32 %v1737, 1.442695
  %v1739 = vpow.pop %v1738
  %v1740 = vadd.f32 %v1739, 1.0
  %v1741 = vrcp.pop %v1740
  %v1742 = vmul.f32 %v1740, %v1741
  %v1743 = vsub.f32 1.0, %v1742
  %v1744 = vmul.f32 %v1741, %v1743
  %v1745 = vadd.f32 %v1741, %v1744
  %vm1746 = vweird.f32 %v1740
  %vm1747 = vweird.f32 %v1741
  %vm1748 = vmor %vm1746, %vm1747
  %v1749 = vsel %vm1748, %v1741, %v1745
  %v1750 = vand.u32 2147483647, %v1740
  %vm1751 = vcmp.eq.f32.partialorder %v1750, 8.507059e+37
  %v1752 = vand.u32 %v1740, 2147483648
  %v1753 = vor.u32 1.1754944e-38, %v1752
  %v1754 = vsel %vm1751, %v1753, %v1749
  %v1755 = vmul.f32 1.0, %v1754
  %v1756 = vtanh.pop %v1689
  %v1757 = vxor.u32 %v1715, 2147483648
  %v1758 = vmul.f32 %v1757, 1.442695
  %v1759 = vpow.pop %v1758
  %v1760 = vadd.f32 %v1759, 1.0
  %v1761 = vrcp.pop %v1760
  %v1762 = vmul.f32 %v1760, %v1761
  %v1763 = vsub.f32 1.0, %v1762
  %v1764 = vmul.f32 %v1761, %v1763
  %v1765 = vadd.f32 %v1761, %v1764
  %vm1766 = vweird.f32 %v1760
  %vm1767 = vweird.f32 %v1761
  %vm1768 = vmor %vm1766, %vm1767
  %v1769 = vsel %vm1768, %v1761, %v1765
  %v1770 = vand.u32 2147483647, %v1760
  %vm1771 = vcmp.eq.f32.partialorder %v1770, 8.507059e+37
  %v1772 = vand.u32 %v1760, 2147483648
  %v1773 = vor.u32 1.1754944e-38, %v1772
  %v1774 = vsel %vm1771, %v1773, %v1769
  %v1775 = vmul.f32 1.0, %v1774
  %v1776 = vmul.f32 %v1755, %v1608
  %v1777 = vmul.f32 %v1736, %v1756
  %v1778 = vadd.f32 %v1776, %v1777
  %v1779 = vtanh.pop %v1778
  %v1780 = vmul.f32 %v1775, %v1779
  %1781 = vst [vmem:[#allocation2] sm:$0xff] %v1780
  %1782 = vst [vmem:[#allocation3] sm:$0xff] %v1778
  // Predicated region
  $region26: #{rnn_forward.1} parent=0 // pred_check
    %p1783 = pneg %p20
  $region27: #{rnn_forward.1} parent=0 // pred_check_branch
    %1785 = sbr.rel (%p1783) target = $region29
  $region28: #{rnn_forward.1} parent=0 // pred_region
    %v1786 = vpack.c.bf16 %v1780, %v1780
    %v1787 = vld [vmem:[%s3] sm:$0xf]
    %v1788 = vld [vmem:[%s3 + $0x4] sm:$0xf]
    %v1789 = vld [vmem:[%s3 + $0x8] sm:$0xf]
    %v1790 = vld [vmem:[%s3 + $0xc] sm:$0xf]
    %v1791 = vld [vmem:[%s3 + $0x10] sm:$0xf]
    %v1792 = vld [vmem:[%s3 + $0x14] sm:$0xf]
    %v1793 = vld [vmem:[%s3 + $0x18] sm:$0xf]
    %v1794 = vld [vmem:[%s3 + $0x1c] sm:$0xf]
    %v1795 = vld [vmem:[%s3 + $0x20] sm:$0xf]
    %v1796 = vld [vmem:[%s3 + $0x24] sm:$0xf]
    %v1797 = vld [vmem:[%s3 + $0x28] sm:$0xf]
    %v1798 = vld [vmem:[%s3 + $0x2c] sm:$0xf]
    %v1799 = vld [vmem:[%s3 + $0x30] sm:$0xf]
    %v1800 = vld [vmem:[%s3 + $0x34] sm:$0xf]
    %v1801 = vld [vmem:[%s3 + $0x38] sm:$0xf]
    %v1802 = vld [vmem:[%s3 + $0x3c] sm:$0xf]
    %v1803 = vld [vmem:[%s4] sm:$0x1]
    %v1805 = vperm.slane %v1803, 0
    %v1823 = vunpack.c.l.b16 %v1787
    %v1824 = vunpack.c.l.b16 %v1788
    %v1825 = vunpack.c.l.b16 %v1789
    %v1826 = vunpack.c.l.b16 %v1790
    %v1827 = vunpack.c.l.b16 %v1791
    %v1828 = vunpack.c.l.b16 %v1792
    %v1829 = vunpack.c.l.b16 %v1793
    %v1830 = vunpack.c.l.b16 %v1794
    %v1831 = vunpack.c.l.b16 %v1795
    %v1832 = vunpack.c.l.b16 %v1796
    %v1833 = vunpack.c.l.b16 %v1797
    %v1834 = vunpack.c.l.b16 %v1798
    %v1835 = vunpack.c.l.b16 %v1799
    %v1836 = vunpack.c.l.b16 %v1800
    %v1837 = vunpack.c.l.b16 %v1801
    %v1838 = vunpack.c.l.b16 %v1802
    %v1839 = vpack.c.b16 %v1824, %v1823
    %v1840 = vpack.c.b16 %v1826, %v1825
    %v1841 = vpack.c.b16 %v1828, %v1827
    %v1842 = vpack.c.b16 %v1830, %v1829
    %v1843 = vpack.c.b16 %v1832, %v1831
    %v1844 = vpack.c.b16 %v1834, %v1833
    %v1845 = vpack.c.b16 %v1836, %v1835
    %v1846 = vpack.c.b16 %v1838, %v1837
    %1855 = vmatpush.bf16.msra.mxu0 %v1846
    %1856 = vmatpush.bf16.msra.mxu0 %v1845
    %1857 = vmatpush.bf16.msra.mxu0 %v1844
    %1858 = vmatpush.bf16.msra.mxu0 %v1843
    %1859 = vmatpush.bf16.msra.mxu0 %v1842
    %1860 = vmatpush.bf16.msra.mxu0 %v1841
    %1861 = vmatpush.bf16.msra.mxu0 %v1840
    %1862 = vmatpush.bf16.msra.mxu0 %v1839
    %1863 = vmatmul.bf16.gmra.mxu0 %v1786
    %v1864 = vpop.f32.mrf.mxu0
    %v1865 = vadd.f32 %v1805, %v1864
    %v1866 = vpop.f32.mrf.mxu0
    %1867 = vdwg.mxu0
    %1868 = vst [vmem:[%s5] sm:$0xff] %v1865
  $region29: #{rnn_forward.1} parent=0 // pred_fallthru
    _
  // Predicated region
  $region30: #{rnn_forward.1} parent=0 // pred_check
    _
  $region31: #{rnn_forward.1} parent=0 // pred_check_branch
    %1870 = sbr.rel (0) target = $region33
  $region32: #{rnn_forward.1} parent=0 // pred_region
    _
  $region33: #{rnn_forward.1} parent=0 // pred_fallthru
    _
  // Predicated region
  $region34: #{rnn_forward.1} parent=0 // pred_check
    _
  $region35: #{rnn_forward.1} parent=0 // pred_check_branch
    %1872 = sbr.rel (0) target = $region37
  $region36: #{rnn_forward.1} parent=0 // pred_region
    _
  $region37: #{rnn_forward.1} parent=0 // pred_fallthru
    _

</llo_original>
